<compile_context>
chip_gen: v6e
topology: v6e:2x2x1
jax: 0.10.0
libtpu: 0.0.40
codegen_flags: <defaults>
</compile_context>

<pallas_src>
import functools
import math

import jax
import jax.numpy as jnp
from jax.experimental import pallas as pl
from jax.experimental.pallas import tpu as pltpu

# Problem sizes (small, TPU-tile friendly: F and W are lane-aligned at 128,
# T matches the 8-sublane vreg height).
B, C, T, W, F = 2, 4, 8, 128, 128
NAN_TO_NUM = -1.0


def _linear_featurizer_kernel(frames_ref, proj_ref, out_ref, *,
                              b_size, n_chan, n_frames, nan_value):
    # frames_ref: (B*C*T, W)   proj_ref: (W, F)   out_ref: (B, 8, F)
    n_freq = proj_ref.shape[1]

    # --- synthetic spectrogram: ONE MXU push for the whole batch ------------
    p = jnp.dot(frames_ref[...], proj_ref[...],
                preferred_element_type=jnp.float32)        # (B*C*T, F)
    sq = p * p                                              # power spectrogram

    i_idx = jax.lax.broadcasted_iota(jnp.int32, (n_frames, n_freq), 0)
    fmax = jnp.finfo(jnp.float32).max

    def fix(v):
        # torch.nan_to_num(-1): NaN -> nan_value, +/-inf -> +/-finfo.max
        v = jnp.where(jnp.isnan(v), jnp.float32(nan_value), v)
        return jnp.clip(v, -fmax, fmax)

    for b in range(b_size):
        # --- channel mean -> (T, F) via tile-aligned static sublane slices --
        base = (b * n_chan) * n_frames
        acc = sq[base:base + n_frames, :]
        for c in range(1, n_chan):
            off = (b * n_chan + c) * n_frames
            acc = acc + sq[off:off + n_frames, :]
        spec_b = acc * (1.0 / n_chan)                       # (T, F)

        # --- moment statistics over the time axis (population moments) ------
        mean_ = jnp.mean(spec_b, axis=0, keepdims=True)     # (1, F)
        diffs = spec_b - mean_
        var = jnp.mean(diffs * diffs, axis=0, keepdims=True)
        stds = jnp.sqrt(var)                                # output uses sqrt
        inv_std = jax.lax.rsqrt(var)                        # EUP; z via multiply
        z = diffs * inv_std
        z2 = z * z
        skews = jnp.mean(z2 * z, axis=0, keepdims=True)
        kurt = jnp.mean(z2 * z2, axis=0, keepdims=True) - 3.0

        # --- exact quantiles via full-vreg stable rank counting --------------
        # rank[i] = #{j : spec[j] < spec[i]} + #{j < i : spec[j] == spec[i]}
        ranks = jnp.zeros((n_frames, n_freq), jnp.int32)
        for j in range(n_frames):
            row_j = spec_b[j:j + 1, :]                      # (1, F) sublane bcast
            lt = row_j < spec_b                             # (T, F)
            tie = jnp.logical_and(row_j == spec_b, i_idx > j)   # j < i tie-break
            ranks = ranks + jnp.logical_or(lt, tie).astype(jnp.int32)

        os_cache = {}

        def order_stat(k):
            if k not in os_cache:
                os_cache[k] = jnp.sum(
                    jnp.where(ranks == k, spec_b, jnp.float32(0.0)),
                    axis=0, keepdims=True)                  # (1, F)
            return os_cache[k]

        def quantile(q):
            pos = q * (n_frames - 1)
            lo = int(math.floor(pos))
            hi = int(math.ceil(pos))
            v_lo = order_stat(lo)
            if hi == lo:
                return v_lo
            return v_lo + jnp.float32(pos - lo) * (order_stat(hi) - v_lo)

        q25 = quantile(0.25)
        q50 = quantile(0.50)
        q75 = quantile(0.75)
        maxes = jnp.max(spec_b, axis=0, keepdims=True)      # quantile(1.0)

        # --- direct lane-dense row stores (no concat) ------------------------
        stats = (mean_, stds, skews, kurt, q25, q50, q75, maxes)
        for k, v in enumerate(stats):
            out_ref[b, k:k + 1, :] = fix(v)


def linear_featurizer(x, proj):
    """x: (B, C, L) waveform, L = T*W.  Returns (B, 8*F) features."""
    bx, cx, l = x.shape
    assert l == T * W and cx == C
    frames2d = x.reshape(bx * cx * T, W)                    # (B*C*T, W)
    kernel = functools.partial(
        _linear_featurizer_kernel,
        b_size=bx, n_chan=cx, n_frames=T, nan_value=NAN_TO_NUM)
    out = pl.pallas_call(
        kernel,
        out_shape=jax.ShapeDtypeStruct((bx, 8, F), jnp.float32),
        # Whole problem (~100 KiB) in VMEM, single invocation (no grid).
        in_specs=[pl.BlockSpec(memory_space=pltpu.MemorySpace.VMEM),
                  pl.BlockSpec(memory_space=pltpu.MemorySpace.VMEM)],
        out_specs=pl.BlockSpec(memory_space=pltpu.MemorySpace.VMEM),
    )(frames2d, proj)
    return out.reshape(bx, 8 * F)


def linear_featurizer_ref(x, proj):
    """Pure-JAX reference mirroring the torch forward (same synthetic
    spectrogram featurizer)."""
    bx = x.shape[0]
    frames = x.reshape(bx, C, T, W)
    spec = jnp.einsum("bctw,wf->bctf", frames, proj) ** 2   # (B, C, T, F)
    spec = spec.mean(axis=1)                                # (B, T, F)
    spec = jnp.transpose(spec, (1, 0, 2))                   # (T, B, F) ~ permute(2,0,1)
    means = spec.mean(0)
    diffs = spec - means
    var = jnp.mean(diffs ** 2, 0)
    stds = jnp.sqrt(var)
    z = diffs / stds
    skews = jnp.mean(z ** 3, 0)
    kurt = jnp.mean(z ** 4, 0) - 3.0
    q25 = jnp.quantile(spec, 0.25, axis=0)
    q50 = jnp.quantile(spec, 0.50, axis=0)
    q75 = jnp.quantile(spec, 0.75, axis=0)
    maxes = jnp.quantile(spec, 1.0, axis=0)
    feats = jnp.stack([means, stds, skews, kurt, q25, q50, q75, maxes])  # (8,B,F)
    feats = jnp.nan_to_num(feats, nan=NAN_TO_NUM)
    feats = jnp.transpose(feats, (1, 0, 2))
    return feats.reshape(bx, -1)


if __name__ == "__main__":
    key = jax.random.PRNGKey(0)
    kx, kp = jax.random.split(key)
    x = jax.random.normal(kx, (B, C, T * W), dtype=jnp.float32)
    # deterministic synthetic spectrogram-featurizer weights
    proj = jax.random.normal(kp, (W, F), dtype=jnp.float32) * (1.0 / math.sqrt(W))

    out = jax.block_until_ready(linear_featurizer(x, proj))
    ref = linear_featurizer_ref(x, proj)

    assert out.shape == (B, 8 * F), out.shape
    assert jnp.allclose(out, ref, rtol=2e-3, atol=2e-3), float(
        jnp.max(jnp.abs(out - ref)))
    print("KERNEL_OK")
</pallas_src>

<mosaic_0001>
module attributes {stable_mosaic.version = 11 : i64} {
  func.func @_linear_featurizer_kernel(%arg0: memref<64x128xf32, #tpu.memory_space<vmem>>, %arg1: memref<128x128xf32, #tpu.memory_space<vmem>>, %arg2: memref<2x8x128xf32, #tpu.memory_space<vmem>>) attributes {dimension_semantics = [], scalar_prefetch = 0 : i64, scratch_operands = 0 : i64, tpu.core_type = #tpu.core_type<tc>} {
    %c0 = arith.constant 0 : index
    %c0_0 = arith.constant 0 : index
    %0 = vector.load %arg0[%c0, %c0_0] : memref<64x128xf32, #tpu.memory_space<vmem>>, vector<64x128xf32>
    %c0_1 = arith.constant 0 : index
    %c0_2 = arith.constant 0 : index
    %1 = vector.load %arg1[%c0_1, %c0_2] : memref<128x128xf32, #tpu.memory_space<vmem>>, vector<128x128xf32>
    %cst = arith.constant dense<0.000000e+00> : vector<64x128xf32>
    %2 = tpu.matmul %0, %1, %cst {dimension_numbers = #tpu.dot_dimension_numbers<[1], [0], [0], [1], [0, 0, 1, 1], [], []>} : vector<64x128xf32>, vector<128x128xf32>, vector<64x128xf32> -> vector<64x128xf32>
    %3 = arith.mulf %2, %2 : vector<64x128xf32>
    %4 = tpu.iota {dimensions = array<i32: 0>} : vector<8x128xi32>
    %5 = vector.extract_strided_slice %3 {offsets = [0, 0], sizes = [8, 128], strides = [1, 1]} : vector<64x128xf32> to vector<8x128xf32>
    %6 = vector.extract_strided_slice %3 {offsets = [8, 0], sizes = [8, 128], strides = [1, 1]} : vector<64x128xf32> to vector<8x128xf32>
    %7 = arith.addf %5, %6 : vector<8x128xf32>
    %8 = vector.extract_strided_slice %3 {offsets = [16, 0], sizes = [8, 128], strides = [1, 1]} : vector<64x128xf32> to vector<8x128xf32>
    %9 = arith.addf %7, %8 : vector<8x128xf32>
    %10 = vector.extract_strided_slice %3 {offsets = [24, 0], sizes = [8, 128], strides = [1, 1]} : vector<64x128xf32> to vector<8x128xf32>
    %11 = arith.addf %9, %10 : vector<8x128xf32>
    %cst_3 = arith.constant 2.500000e-01 : f32
    %12 = vector.broadcast %cst_3 : f32 to vector<8x128xf32>
    %13 = arith.mulf %11, %12 : vector<8x128xf32>
    %cst_4 = arith.constant dense<0.000000e+00> : vector<128xf32>
    %14 = vector.multi_reduction <add>, %13, %cst_4 [0] : vector<8x128xf32> to vector<128xf32>
    %15 = vector.shape_cast %14 : vector<128xf32> to vector<1x128xf32>
    %cst_5 = arith.constant 8.000000e+00 : f32
    %16 = vector.broadcast %cst_5 : f32 to vector<1x128xf32>
    %17 = arith.divf %15, %16 : vector<1x128xf32>
    %18 = vector.broadcast %17 : vector<1x128xf32> to vector<8x128xf32>
    %19 = arith.subf %13, %18 : vector<8x128xf32>
    %20 = arith.mulf %19, %19 : vector<8x128xf32>
    %cst_6 = arith.constant dense<0.000000e+00> : vector<128xf32>
    %21 = vector.multi_reduction <add>, %20, %cst_6 [0] : vector<8x128xf32> to vector<128xf32>
    %22 = vector.shape_cast %21 : vector<128xf32> to vector<1x128xf32>
    %cst_7 = arith.constant 8.000000e+00 : f32
    %23 = vector.broadcast %cst_7 : f32 to vector<1x128xf32>
    %24 = arith.divf %22, %23 : vector<1x128xf32>
    %25 = math.sqrt %24 : vector<1x128xf32>
    %26 = math.rsqrt %24 : vector<1x128xf32>
    %27 = vector.broadcast %26 : vector<1x128xf32> to vector<8x128xf32>
    %28 = arith.mulf %19, %27 : vector<8x128xf32>
    %29 = arith.mulf %28, %28 : vector<8x128xf32>
    %30 = arith.mulf %29, %28 : vector<8x128xf32>
    %cst_8 = arith.constant dense<0.000000e+00> : vector<128xf32>
    %31 = vector.multi_reduction <add>, %30, %cst_8 [0] : vector<8x128xf32> to vector<128xf32>
    %32 = vector.shape_cast %31 : vector<128xf32> to vector<1x128xf32>
    %cst_9 = arith.constant 8.000000e+00 : f32
    %33 = vector.broadcast %cst_9 : f32 to vector<1x128xf32>
    %34 = arith.divf %32, %33 : vector<1x128xf32>
    %35 = arith.mulf %29, %29 : vector<8x128xf32>
    %cst_10 = arith.constant dense<0.000000e+00> : vector<128xf32>
    %36 = vector.multi_reduction <add>, %35, %cst_10 [0] : vector<8x128xf32> to vector<128xf32>
    %37 = vector.shape_cast %36 : vector<128xf32> to vector<1x128xf32>
    %cst_11 = arith.constant 8.000000e+00 : f32
    %38 = vector.broadcast %cst_11 : f32 to vector<1x128xf32>
    %39 = arith.divf %37, %38 : vector<1x128xf32>
    %cst_12 = arith.constant 3.000000e+00 : f32
    %40 = vector.broadcast %cst_12 : f32 to vector<1x128xf32>
    %41 = arith.subf %39, %40 : vector<1x128xf32>
    %c0_i32 = arith.constant 0 : i32
    %42 = vector.broadcast %c0_i32 : i32 to vector<8x128xi32>
    %43 = vector.extract_strided_slice %13 {offsets = [0, 0], sizes = [1, 128], strides = [1, 1]} : vector<8x128xf32> to vector<1x128xf32>
    %44 = vector.broadcast %43 : vector<1x128xf32> to vector<8x128xf32>
    %45 = arith.cmpf olt, %44, %13 : vector<8x128xf32>
    %46 = vector.broadcast %43 : vector<1x128xf32> to vector<8x128xf32>
    %47 = arith.cmpf oeq, %46, %13 : vector<8x128xf32>
    %c0_i32_13 = arith.constant 0 : i32
    %48 = vector.broadcast %c0_i32_13 : i32 to vector<8x128xi32>
    %49 = arith.cmpi sgt, %4, %48 : vector<8x128xi32>
    %50 = arith.andi %47, %49 : vector<8x128xi1>
    %51 = arith.ori %45, %50 : vector<8x128xi1>
    %52 = arith.extui %51 : vector<8x128xi1> to vector<8x128xi32>
    %53 = arith.addi %42, %52 : vector<8x128xi32>
    %54 = vector.extract_strided_slice %13 {offsets = [1, 0], sizes = [1, 128], strides = [1, 1]} : vector<8x128xf32> to vector<1x128xf32>
    %55 = vector.broadcast %54 : vector<1x128xf32> to vector<8x128xf32>
    %56 = arith.cmpf olt, %55, %13 : vector<8x128xf32>
    %57 = vector.broadcast %54 : vector<1x128xf32> to vector<8x128xf32>
    %58 = arith.cmpf oeq, %57, %13 : vector<8x128xf32>
    %c1_i32 = arith.constant 1 : i32
    %59 = vector.broadcast %c1_i32 : i32 to vector<8x128xi32>
    %60 = arith.cmpi sgt, %4, %59 : vector<8x128xi32>
    %61 = arith.andi %58, %60 : vector<8x128xi1>
    %62 = arith.ori %56, %61 : vector<8x128xi1>
    %63 = arith.extui %62 : vector<8x128xi1> to vector<8x128xi32>
    %64 = arith.addi %53, %63 : vector<8x128xi32>
    %65 = vector.extract_strided_slice %13 {offsets = [2, 0], sizes = [1, 128], strides = [1, 1]} : vector<8x128xf32> to vector<1x128xf32>
    %66 = vector.broadcast %65 : vector<1x128xf32> to vector<8x128xf32>
    %67 = arith.cmpf olt, %66, %13 : vector<8x128xf32>
    %68 = vector.broadcast %65 : vector<1x128xf32> to vector<8x128xf32>
    %69 = arith.cmpf oeq, %68, %13 : vector<8x128xf32>
    %c2_i32 = arith.constant 2 : i32
    %70 = vector.broadcast %c2_i32 : i32 to vector<8x128xi32>
    %71 = arith.cmpi sgt, %4, %70 : vector<8x128xi32>
    %72 = arith.andi %69, %71 : vector<8x128xi1>
    %73 = arith.ori %67, %72 : vector<8x128xi1>
    %74 = arith.extui %73 : vector<8x128xi1> to vector<8x128xi32>
    %75 = arith.addi %64, %74 : vector<8x128xi32>
    %76 = vector.extract_strided_slice %13 {offsets = [3, 0], sizes = [1, 128], strides = [1, 1]} : vector<8x128xf32> to vector<1x128xf32>
    %77 = vector.broadcast %76 : vector<1x128xf32> to vector<8x128xf32>
    %78 = arith.cmpf olt, %77, %13 : vector<8x128xf32>
    %79 = vector.broadcast %76 : vector<1x128xf32> to vector<8x128xf32>
    %80 = arith.cmpf oeq, %79, %13 : vector<8x128xf32>
    %c3_i32 = arith.constant 3 : i32
    %81 = vector.broadcast %c3_i32 : i32 to vector<8x128xi32>
    %82 = arith.cmpi sgt, %4, %81 : vector<8x128xi32>
    %83 = arith.andi %80, %82 : vector<8x128xi1>
    %84 = arith.ori %78, %83 : vector<8x128xi1>
    %85 = arith.extui %84 : vector<8x128xi1> to vector<8x128xi32>
    %86 = arith.addi %75, %85 : vector<8x128xi32>
    %87 = vector.extract_strided_slice %13 {offsets = [4, 0], sizes = [1, 128], strides = [1, 1]} : vector<8x128xf32> to vector<1x128xf32>
    %88 = vector.broadcast %87 : vector<1x128xf32> to vector<8x128xf32>
    %89 = arith.cmpf olt, %88, %13 : vector<8x128xf32>
    %90 = vector.broadcast %87 : vector<1x128xf32> to vector<8x128xf32>
    %91 = arith.cmpf oeq, %90, %13 : vector<8x128xf32>
    %c4_i32 = arith.constant 4 : i32
    %92 = vector.broadcast %c4_i32 : i32 to vector<8x128xi32>
    %93 = arith.cmpi sgt, %4, %92 : vector<8x128xi32>
    %94 = arith.andi %91, %93 : vector<8x128xi1>
    %95 = arith.ori %89, %94 : vector<8x128xi1>
    %96 = arith.extui %95 : vector<8x128xi1> to vector<8x128xi32>
    %97 = arith.addi %86, %96 : vector<8x128xi32>
    %98 = vector.extract_strided_slice %13 {offsets = [5, 0], sizes = [1, 128], strides = [1, 1]} : vector<8x128xf32> to vector<1x128xf32>
    %99 = vector.broadcast %98 : vector<1x128xf32> to vector<8x128xf32>
    %100 = arith.cmpf olt, %99, %13 : vector<8x128xf32>
    %101 = vector.broadcast %98 : vector<1x128xf32> to vector<8x128xf32>
    %102 = arith.cmpf oeq, %101, %13 : vector<8x128xf32>
    %c5_i32 = arith.constant 5 : i32
    %103 = vector.broadcast %c5_i32 : i32 to vector<8x128xi32>
    %104 = arith.cmpi sgt, %4, %103 : vector<8x128xi32>
    %105 = arith.andi %102, %104 : vector<8x128xi1>
    %106 = arith.ori %100, %105 : vector<8x128xi1>
    %107 = arith.extui %106 : vector<8x128xi1> to vector<8x128xi32>
    %108 = arith.addi %97, %107 : vector<8x128xi32>
    %109 = vector.extract_strided_slice %13 {offsets = [6, 0], sizes = [1, 128], strides = [1, 1]} : vector<8x128xf32> to vector<1x128xf32>
    %110 = vector.broadcast %109 : vector<1x128xf32> to vector<8x128xf32>
    %111 = arith.cmpf olt, %110, %13 : vector<8x128xf32>
    %112 = vector.broadcast %109 : vector<1x128xf32> to vector<8x128xf32>
    %113 = arith.cmpf oeq, %112, %13 : vector<8x128xf32>
    %c6_i32 = arith.constant 6 : i32
    %114 = vector.broadcast %c6_i32 : i32 to vector<8x128xi32>
    %115 = arith.cmpi sgt, %4, %114 : vector<8x128xi32>
    %116 = arith.andi %113, %115 : vector<8x128xi1>
    %117 = arith.ori %111, %116 : vector<8x128xi1>
    %118 = arith.extui %117 : vector<8x128xi1> to vector<8x128xi32>
    %119 = arith.addi %108, %118 : vector<8x128xi32>
    %120 = vector.extract_strided_slice %13 {offsets = [7, 0], sizes = [1, 128], strides = [1, 1]} : vector<8x128xf32> to vector<1x128xf32>
    %121 = vector.broadcast %120 : vector<1x128xf32> to vector<8x128xf32>
    %122 = arith.cmpf olt, %121, %13 : vector<8x128xf32>
    %123 = vector.broadcast %120 : vector<1x128xf32> to vector<8x128xf32>
    %124 = arith.cmpf oeq, %123, %13 : vector<8x128xf32>
    %c7_i32 = arith.constant 7 : i32
    %125 = vector.broadcast %c7_i32 : i32 to vector<8x128xi32>
    %126 = arith.cmpi sgt, %4, %125 : vector<8x128xi32>
    %127 = arith.andi %124, %126 : vector<8x128xi1>
    %128 = arith.ori %122, %127 : vector<8x128xi1>
    %129 = arith.extui %128 : vector<8x128xi1> to vector<8x128xi32>
    %130 = arith.addi %119, %129 : vector<8x128xi32>
    %c1_i32_14 = arith.constant 1 : i32
    %131 = vector.broadcast %c1_i32_14 : i32 to vector<8x128xi32>
    %132 = arith.cmpi eq, %130, %131 : vector<8x128xi32>
    %cst_15 = arith.constant 0.000000e+00 : f32
    %133 = vector.broadcast %cst_15 : f32 to vector<8x128xf32>
    %134 = arith.select %132, %13, %133 : vector<8x128xi1>, vector<8x128xf32>
    %cst_16 = arith.constant dense<0.000000e+00> : vector<128xf32>
    %135 = vector.multi_reduction <add>, %134, %cst_16 [0] : vector<8x128xf32> to vector<128xf32>
    %136 = vector.shape_cast %135 : vector<128xf32> to vector<1x128xf32>
    %c2_i32_17 = arith.constant 2 : i32
    %137 = vector.broadcast %c2_i32_17 : i32 to vector<8x128xi32>
    %138 = arith.cmpi eq, %130, %137 : vector<8x128xi32>
    %cst_18 = arith.constant 0.000000e+00 : f32
    %139 = vector.broadcast %cst_18 : f32 to vector<8x128xf32>
    %140 = arith.select %138, %13, %139 : vector<8x128xi1>, vector<8x128xf32>
    %cst_19 = arith.constant dense<0.000000e+00> : vector<128xf32>
    %141 = vector.multi_reduction <add>, %140, %cst_19 [0] : vector<8x128xf32> to vector<128xf32>
    %142 = vector.shape_cast %141 : vector<128xf32> to vector<1x128xf32>
    %143 = arith.subf %142, %136 : vector<1x128xf32>
    %cst_20 = arith.constant 7.500000e-01 : f32
    %144 = vector.broadcast %cst_20 : f32 to vector<1x128xf32>
    %145 = arith.mulf %144, %143 : vector<1x128xf32>
    %146 = arith.addf %136, %145 : vector<1x128xf32>
    %c3_i32_21 = arith.constant 3 : i32
    %147 = vector.broadcast %c3_i32_21 : i32 to vector<8x128xi32>
    %148 = arith.cmpi eq, %130, %147 : vector<8x128xi32>
    %cst_22 = arith.constant 0.000000e+00 : f32
    %149 = vector.broadcast %cst_22 : f32 to vector<8x128xf32>
    %150 = arith.select %148, %13, %149 : vector<8x128xi1>, vector<8x128xf32>
    %cst_23 = arith.constant dense<0.000000e+00> : vector<128xf32>
    %151 = vector.multi_reduction <add>, %150, %cst_23 [0] : vector<8x128xf32> to vector<128xf32>
    %152 = vector.shape_cast %151 : vector<128xf32> to vector<1x128xf32>
    %c4_i32_24 = arith.constant 4 : i32
    %153 = vector.broadcast %c4_i32_24 : i32 to vector<8x128xi32>
    %154 = arith.cmpi eq, %130, %153 : vector<8x128xi32>
    %cst_25 = arith.constant 0.000000e+00 : f32
    %155 = vector.broadcast %cst_25 : f32 to vector<8x128xf32>
    %156 = arith.select %154, %13, %155 : vector<8x128xi1>, vector<8x128xf32>
    %cst_26 = arith.constant dense<0.000000e+00> : vector<128xf32>
    %157 = vector.multi_reduction <add>, %156, %cst_26 [0] : vector<8x128xf32> to vector<128xf32>
    %158 = vector.shape_cast %157 : vector<128xf32> to vector<1x128xf32>
    %159 = arith.subf %158, %152 : vector<1x128xf32>
    %cst_27 = arith.constant 5.000000e-01 : f32
    %160 = vector.broadcast %cst_27 : f32 to vector<1x128xf32>
    %161 = arith.mulf %160, %159 : vector<1x128xf32>
    %162 = arith.addf %152, %161 : vector<1x128xf32>
    %c5_i32_28 = arith.constant 5 : i32
    %163 = vector.broadcast %c5_i32_28 : i32 to vector<8x128xi32>
    %164 = arith.cmpi eq, %130, %163 : vector<8x128xi32>
    %cst_29 = arith.constant 0.000000e+00 : f32
    %165 = vector.broadcast %cst_29 : f32 to vector<8x128xf32>
    %166 = arith.select %164, %13, %165 : vector<8x128xi1>, vector<8x128xf32>
    %cst_30 = arith.constant dense<0.000000e+00> : vector<128xf32>
    %167 = vector.multi_reduction <add>, %166, %cst_30 [0] : vector<8x128xf32> to vector<128xf32>
    %168 = vector.shape_cast %167 : vector<128xf32> to vector<1x128xf32>
    %c6_i32_31 = arith.constant 6 : i32
    %169 = vector.broadcast %c6_i32_31 : i32 to vector<8x128xi32>
    %170 = arith.cmpi eq, %130, %169 : vector<8x128xi32>
    %cst_32 = arith.constant 0.000000e+00 : f32
    %171 = vector.broadcast %cst_32 : f32 to vector<8x128xf32>
    %172 = arith.select %170, %13, %171 : vector<8x128xi1>, vector<8x128xf32>
    %cst_33 = arith.constant dense<0.000000e+00> : vector<128xf32>
    %173 = vector.multi_reduction <add>, %172, %cst_33 [0] : vector<8x128xf32> to vector<128xf32>
    %174 = vector.shape_cast %173 : vector<128xf32> to vector<1x128xf32>
    %175 = arith.subf %174, %168 : vector<1x128xf32>
    %cst_34 = arith.constant 2.500000e-01 : f32
    %176 = vector.broadcast %cst_34 : f32 to vector<1x128xf32>
    %177 = arith.mulf %176, %175 : vector<1x128xf32>
    %178 = arith.addf %168, %177 : vector<1x128xf32>
    %cst_35 = arith.constant dense<0xFF800000> : vector<128xf32>
    %179 = vector.multi_reduction <maximumf>, %13, %cst_35 [0] : vector<8x128xf32> to vector<128xf32>
    %180 = vector.shape_cast %179 : vector<128xf32> to vector<1x128xf32>
    %181 = arith.cmpf one, %17, %17 : vector<1x128xf32>
    %cst_36 = arith.constant -1.000000e+00 : f32
    %182 = vector.broadcast %cst_36 : f32 to vector<1x128xf32>
    %183 = arith.select %181, %182, %17 : vector<1x128xi1>, vector<1x128xf32>
    %cst_37 = arith.constant -3.40282347E+38 : f32
    %cst_38 = arith.constant 3.40282347E+38 : f32
    %184 = vector.broadcast %cst_37 : f32 to vector<1x128xf32>
    %185 = arith.maximumf %184, %183 : vector<1x128xf32>
    %186 = vector.broadcast %cst_38 : f32 to vector<1x128xf32>
    %187 = arith.minimumf %186, %185 : vector<1x128xf32>
    %c0_39 = arith.constant 0 : index
    %c0_40 = arith.constant 0 : index
    %c0_41 = arith.constant 0 : index
    %188 = vector.load %arg2[%c0_39, %c0_40, %c0_41] : memref<2x8x128xf32, #tpu.memory_space<vmem>>, vector<1x1x128xf32>
    %189 = vector.shape_cast %188 : vector<1x1x128xf32> to vector<1x128xf32>
    %190 = vector.shape_cast %187 : vector<1x128xf32> to vector<1x1x128xf32>
    tpu.vector_store %arg2[%c0_39, %c0_40, %c0_41], %190 {strides = array<i32>} : memref<2x8x128xf32, #tpu.memory_space<vmem>>, vector<1x1x128xf32>,
    %191 = arith.cmpf one, %25, %25 : vector<1x128xf32>
    %cst_42 = arith.constant -1.000000e+00 : f32
    %192 = vector.broadcast %cst_42 : f32 to vector<1x128xf32>
    %193 = arith.select %191, %192, %25 : vector<1x128xi1>, vector<1x128xf32>
    %cst_43 = arith.constant -3.40282347E+38 : f32
    %cst_44 = arith.constant 3.40282347E+38 : f32
    %194 = vector.broadcast %cst_43 : f32 to vector<1x128xf32>
    %195 = arith.maximumf %194, %193 : vector<1x128xf32>
    %196 = vector.broadcast %cst_44 : f32 to vector<1x128xf32>
    %197 = arith.minimumf %196, %195 : vector<1x128xf32>
    %c0_45 = arith.constant 0 : index
    %c1 = arith.constant 1 : index
    %c0_46 = arith.constant 0 : index
    %198 = vector.load %arg2[%c0_45, %c1, %c0_46] : memref<2x8x128xf32, #tpu.memory_space<vmem>>, vector<1x1x128xf32>
    %199 = vector.shape_cast %198 : vector<1x1x128xf32> to vector<1x128xf32>
    %200 = vector.shape_cast %197 : vector<1x128xf32> to vector<1x1x128xf32>
    tpu.vector_store %arg2[%c0_45, %c1, %c0_46], %200 {strides = array<i32>} : memref<2x8x128xf32, #tpu.memory_space<vmem>>, vector<1x1x128xf32>,
    %201 = arith.cmpf one, %34, %34 : vector<1x128xf32>
    %cst_47 = arith.constant -1.000000e+00 : f32
    %202 = vector.broadcast %cst_47 : f32 to vector<1x128xf32>
    %203 = arith.select %201, %202, %34 : vector<1x128xi1>, vector<1x128xf32>
    %cst_48 = arith.constant -3.40282347E+38 : f32
    %cst_49 = arith.constant 3.40282347E+38 : f32
    %204 = vector.broadcast %cst_48 : f32 to vector<1x128xf32>
    %205 = arith.maximumf %204, %203 : vector<1x128xf32>
    %206 = vector.broadcast %cst_49 : f32 to vector<1x128xf32>
    %207 = arith.minimumf %206, %205 : vector<1x128xf32>
    %c0_50 = arith.constant 0 : index
    %c2 = arith.constant 2 : index
    %c0_51 = arith.constant 0 : index
    %208 = vector.load %arg2[%c0_50, %c2, %c0_51] : memref<2x8x128xf32, #tpu.memory_space<vmem>>, vector<1x1x128xf32>
    %209 = vector.shape_cast %208 : vector<1x1x128xf32> to vector<1x128xf32>
    %210 = vector.shape_cast %207 : vector<1x128xf32> to vector<1x1x128xf32>
    tpu.vector_store %arg2[%c0_50, %c2, %c0_51], %210 {strides = array<i32>} : memref<2x8x128xf32, #tpu.memory_space<vmem>>, vector<1x1x128xf32>,
    %211 = arith.cmpf one, %41, %41 : vector<1x128xf32>
    %cst_52 = arith.constant -1.000000e+00 : f32
    %212 = vector.broadcast %cst_52 : f32 to vector<1x128xf32>
    %213 = arith.select %211, %212, %41 : vector<1x128xi1>, vector<1x128xf32>
    %cst_53 = arith.constant -3.40282347E+38 : f32
    %cst_54 = arith.constant 3.40282347E+38 : f32
    %214 = vector.broadcast %cst_53 : f32 to vector<1x128xf32>
    %215 = arith.maximumf %214, %213 : vector<1x128xf32>
    %216 = vector.broadcast %cst_54 : f32 to vector<1x128xf32>
    %217 = arith.minimumf %216, %215 : vector<1x128xf32>
    %c0_55 = arith.constant 0 : index
    %c3 = arith.constant 3 : index
    %c0_56 = arith.constant 0 : index
    %218 = vector.load %arg2[%c0_55, %c3, %c0_56] : memref<2x8x128xf32, #tpu.memory_space<vmem>>, vector<1x1x128xf32>
    %219 = vector.shape_cast %218 : vector<1x1x128xf32> to vector<1x128xf32>
    %220 = vector.shape_cast %217 : vector<1x128xf32> to vector<1x1x128xf32>
    tpu.vector_store %arg2[%c0_55, %c3, %c0_56], %220 {strides = array<i32>} : memref<2x8x128xf32, #tpu.memory_space<vmem>>, vector<1x1x128xf32>,
    %221 = arith.cmpf one, %146, %146 : vector<1x128xf32>
    %cst_57 = arith.constant -1.000000e+00 : f32
    %222 = vector.broadcast %cst_57 : f32 to vector<1x128xf32>
    %223 = arith.select %221, %222, %146 : vector<1x128xi1>, vector<1x128xf32>
    %cst_58 = arith.constant -3.40282347E+38 : f32
    %cst_59 = arith.constant 3.40282347E+38 : f32
    %224 = vector.broadcast %cst_58 : f32 to vector<1x128xf32>
    %225 = arith.maximumf %224, %223 : vector<1x128xf32>
    %226 = vector.broadcast %cst_59 : f32 to vector<1x128xf32>
    %227 = arith.minimumf %226, %225 : vector<1x128xf32>
    %c0_60 = arith.constant 0 : index
    %c4 = arith.constant 4 : index
    %c0_61 = arith.constant 0 : index
    %228 = vector.load %arg2[%c0_60, %c4, %c0_61] : memref<2x8x128xf32, #tpu.memory_space<vmem>>, vector<1x1x128xf32>
    %229 = vector.shape_cast %228 : vector<1x1x128xf32> to vector<1x128xf32>
    %230 = vector.shape_cast %227 : vector<1x128xf32> to vector<1x1x128xf32>
    tpu.vector_store %arg2[%c0_60, %c4, %c0_61], %230 {strides = array<i32>} : memref<2x8x128xf32, #tpu.memory_space<vmem>>, vector<1x1x128xf32>,
    %231 = arith.cmpf one, %162, %162 : vector<1x128xf32>
    %cst_62 = arith.constant -1.000000e+00 : f32
    %232 = vector.broadcast %cst_62 : f32 to vector<1x128xf32>
    %233 = arith.select %231, %232, %162 : vector<1x128xi1>, vector<1x128xf32>
    %cst_63 = arith.constant -3.40282347E+38 : f32
    %cst_64 = arith.constant 3.40282347E+38 : f32
    %234 = vector.broadcast %cst_63 : f32 to vector<1x128xf32>
    %235 = arith.maximumf %234, %233 : vector<1x128xf32>
    %236 = vector.broadcast %cst_64 : f32 to vector<1x128xf32>
    %237 = arith.minimumf %236, %235 : vector<1x128xf32>
    %c0_65 = arith.constant 0 : index
    %c5 = arith.constant 5 : index
    %c0_66 = arith.constant 0 : index
    %238 = vector.load %arg2[%c0_65, %c5, %c0_66] : memref<2x8x128xf32, #tpu.memory_space<vmem>>, vector<1x1x128xf32>
    %239 = vector.shape_cast %238 : vector<1x1x128xf32> to vector<1x128xf32>
    %240 = vector.shape_cast %237 : vector<1x128xf32> to vector<1x1x128xf32>
    tpu.vector_store %arg2[%c0_65, %c5, %c0_66], %240 {strides = array<i32>} : memref<2x8x128xf32, #tpu.memory_space<vmem>>, vector<1x1x128xf32>,
    %241 = arith.cmpf one, %178, %178 : vector<1x128xf32>
    %cst_67 = arith.constant -1.000000e+00 : f32
    %242 = vector.broadcast %cst_67 : f32 to vector<1x128xf32>
    %243 = arith.select %241, %242, %178 : vector<1x128xi1>, vector<1x128xf32>
    %cst_68 = arith.constant -3.40282347E+38 : f32
    %cst_69 = arith.constant 3.40282347E+38 : f32
    %244 = vector.broadcast %cst_68 : f32 to vector<1x128xf32>
    %245 = arith.maximumf %244, %243 : vector<1x128xf32>
    %246 = vector.broadcast %cst_69 : f32 to vector<1x128xf32>
    %247 = arith.minimumf %246, %245 : vector<1x128xf32>
    %c0_70 = arith.constant 0 : index
    %c6 = arith.constant 6 : index
    %c0_71 = arith.constant 0 : index
    %248 = vector.load %arg2[%c0_70, %c6, %c0_71] : memref<2x8x128xf32, #tpu.memory_space<vmem>>, vector<1x1x128xf32>
    %249 = vector.shape_cast %248 : vector<1x1x128xf32> to vector<1x128xf32>
    %250 = vector.shape_cast %247 : vector<1x128xf32> to vector<1x1x128xf32>
    tpu.vector_store %arg2[%c0_70, %c6, %c0_71], %250 {strides = array<i32>} : memref<2x8x128xf32, #tpu.memory_space<vmem>>, vector<1x1x128xf32>,
    %251 = arith.cmpf one, %180, %180 : vector<1x128xf32>
    %cst_72 = arith.constant -1.000000e+00 : f32
    %252 = vector.broadcast %cst_72 : f32 to vector<1x128xf32>
    %253 = arith.select %251, %252, %180 : vector<1x128xi1>, vector<1x128xf32>
    %cst_73 = arith.constant -3.40282347E+38 : f32
    %cst_74 = arith.constant 3.40282347E+38 : f32
    %254 = vector.broadcast %cst_73 : f32 to vector<1x128xf32>
    %255 = arith.maximumf %254, %253 : vector<1x128xf32>
    %256 = vector.broadcast %cst_74 : f32 to vector<1x128xf32>
    %257 = arith.minimumf %256, %255 : vector<1x128xf32>
    %c0_75 = arith.constant 0 : index
    %c7 = arith.constant 7 : index
    %c0_76 = arith.constant 0 : index
    %258 = vector.load %arg2[%c0_75, %c7, %c0_76] : memref<2x8x128xf32, #tpu.memory_space<vmem>>, vector<1x1x128xf32>
    %259 = vector.shape_cast %258 : vector<1x1x128xf32> to vector<1x128xf32>
    %260 = vector.shape_cast %257 : vector<1x128xf32> to vector<1x1x128xf32>
    tpu.vector_store %arg2[%c0_75, %c7, %c0_76], %260 {strides = array<i32>} : memref<2x8x128xf32, #tpu.memory_space<vmem>>, vector<1x1x128xf32>,
    %261 = vector.extract_strided_slice %3 {offsets = [32, 0], sizes = [8, 128], strides = [1, 1]} : vector<64x128xf32> to vector<8x128xf32>
    %262 = vector.extract_strided_slice %3 {offsets = [40, 0], sizes = [8, 128], strides = [1, 1]} : vector<64x128xf32> to vector<8x128xf32>
    %263 = arith.addf %261, %262 : vector<8x128xf32>
    %264 = vector.extract_strided_slice %3 {offsets = [48, 0], sizes = [8, 128], strides = [1, 1]} : vector<64x128xf32> to vector<8x128xf32>
    %265 = arith.addf %263, %264 : vector<8x128xf32>
    %266 = vector.extract_strided_slice %3 {offsets = [56, 0], sizes = [8, 128], strides = [1, 1]} : vector<64x128xf32> to vector<8x128xf32>
    %267 = arith.addf %265, %266 : vector<8x128xf32>
    %cst_77 = arith.constant 2.500000e-01 : f32
    %268 = vector.broadcast %cst_77 : f32 to vector<8x128xf32>
    %269 = arith.mulf %267, %268 : vector<8x128xf32>
    %cst_78 = arith.constant dense<0.000000e+00> : vector<128xf32>
    %270 = vector.multi_reduction <add>, %269, %cst_78 [0] : vector<8x128xf32> to vector<128xf32>
    %271 = vector.shape_cast %270 : vector<128xf32> to vector<1x128xf32>
    %cst_79 = arith.constant 8.000000e+00 : f32
    %272 = vector.broadcast %cst_79 : f32 to vector<1x128xf32>
    %273 = arith.divf %271, %272 : vector<1x128xf32>
    %274 = vector.broadcast %273 : vector<1x128xf32> to vector<8x128xf32>
    %275 = arith.subf %269, %274 : vector<8x128xf32>
    %276 = arith.mulf %275, %275 : vector<8x128xf32>
    %cst_80 = arith.constant dense<0.000000e+00> : vector<128xf32>
    %277 = vector.multi_reduction <add>, %276, %cst_80 [0] : vector<8x128xf32> to vector<128xf32>
    %278 = vector.shape_cast %277 : vector<128xf32> to vector<1x128xf32>
    %cst_81 = arith.constant 8.000000e+00 : f32
    %279 = vector.broadcast %cst_81 : f32 to vector<1x128xf32>
    %280 = arith.divf %278, %279 : vector<1x128xf32>
    %281 = math.sqrt %280 : vector<1x128xf32>
    %282 = math.rsqrt %280 : vector<1x128xf32>
    %283 = vector.broadcast %282 : vector<1x128xf32> to vector<8x128xf32>
    %284 = arith.mulf %275, %283 : vector<8x128xf32>
    %285 = arith.mulf %284, %284 : vector<8x128xf32>
    %286 = arith.mulf %285, %284 : vector<8x128xf32>
    %cst_82 = arith.constant dense<0.000000e+00> : vector<128xf32>
    %287 = vector.multi_reduction <add>, %286, %cst_82 [0] : vector<8x128xf32> to vector<128xf32>
    %288 = vector.shape_cast %287 : vector<128xf32> to vector<1x128xf32>
    %cst_83 = arith.constant 8.000000e+00 : f32
    %289 = vector.broadcast %cst_83 : f32 to vector<1x128xf32>
    %290 = arith.divf %288, %289 : vector<1x128xf32>
    %291 = arith.mulf %285, %285 : vector<8x128xf32>
    %cst_84 = arith.constant dense<0.000000e+00> : vector<128xf32>
    %292 = vector.multi_reduction <add>, %291, %cst_84 [0] : vector<8x128xf32> to vector<128xf32>
    %293 = vector.shape_cast %292 : vector<128xf32> to vector<1x128xf32>
    %cst_85 = arith.constant 8.000000e+00 : f32
    %294 = vector.broadcast %cst_85 : f32 to vector<1x128xf32>
    %295 = arith.divf %293, %294 : vector<1x128xf32>
    %cst_86 = arith.constant 3.000000e+00 : f32
    %296 = vector.broadcast %cst_86 : f32 to vector<1x128xf32>
    %297 = arith.subf %295, %296 : vector<1x128xf32>
    %c0_i32_87 = arith.constant 0 : i32
    %298 = vector.broadcast %c0_i32_87 : i32 to vector<8x128xi32>
    %299 = vector.extract_strided_slice %269 {offsets = [0, 0], sizes = [1, 128], strides = [1, 1]} : vector<8x128xf32> to vector<1x128xf32>
    %300 = vector.broadcast %299 : vector<1x128xf32> to vector<8x128xf32>
    %301 = arith.cmpf olt, %300, %269 : vector<8x128xf32>
    %302 = vector.broadcast %299 : vector<1x128xf32> to vector<8x128xf32>
    %303 = arith.cmpf oeq, %302, %269 : vector<8x128xf32>
    %c0_i32_88 = arith.constant 0 : i32
    %304 = vector.broadcast %c0_i32_88 : i32 to vector<8x128xi32>
    %305 = arith.cmpi sgt, %4, %304 : vector<8x128xi32>
    %306 = arith.andi %303, %305 : vector<8x128xi1>
    %307 = arith.ori %301, %306 : vector<8x128xi1>
    %308 = arith.extui %307 : vector<8x128xi1> to vector<8x128xi32>
    %309 = arith.addi %298, %308 : vector<8x128xi32>
    %310 = vector.extract_strided_slice %269 {offsets = [1, 0], sizes = [1, 128], strides = [1, 1]} : vector<8x128xf32> to vector<1x128xf32>
    %311 = vector.broadcast %310 : vector<1x128xf32> to vector<8x128xf32>
    %312 = arith.cmpf olt, %311, %269 : vector<8x128xf32>
    %313 = vector.broadcast %310 : vector<1x128xf32> to vector<8x128xf32>
    %314 = arith.cmpf oeq, %313, %269 : vector<8x128xf32>
    %c1_i32_89 = arith.constant 1 : i32
    %315 = vector.broadcast %c1_i32_89 : i32 to vector<8x128xi32>
    %316 = arith.cmpi sgt, %4, %315 : vector<8x128xi32>
    %317 = arith.andi %314, %316 : vector<8x128xi1>
    %318 = arith.ori %312, %317 : vector<8x128xi1>
    %319 = arith.extui %318 : vector<8x128xi1> to vector<8x128xi32>
    %320 = arith.addi %309, %319 : vector<8x128xi32>
    %321 = vector.extract_strided_slice %269 {offsets = [2, 0], sizes = [1, 128], strides = [1, 1]} : vector<8x128xf32> to vector<1x128xf32>
    %322 = vector.broadcast %321 : vector<1x128xf32> to vector<8x128xf32>
    %323 = arith.cmpf olt, %322, %269 : vector<8x128xf32>
    %324 = vector.broadcast %321 : vector<1x128xf32> to vector<8x128xf32>
    %325 = arith.cmpf oeq, %324, %269 : vector<8x128xf32>
    %c2_i32_90 = arith.constant 2 : i32
    %326 = vector.broadcast %c2_i32_90 : i32 to vector<8x128xi32>
    %327 = arith.cmpi sgt, %4, %326 : vector<8x128xi32>
    %328 = arith.andi %325, %327 : vector<8x128xi1>
    %329 = arith.ori %323, %328 : vector<8x128xi1>
    %330 = arith.extui %329 : vector<8x128xi1> to vector<8x128xi32>
    %331 = arith.addi %320, %330 : vector<8x128xi32>
    %332 = vector.extract_strided_slice %269 {offsets = [3, 0], sizes = [1, 128], strides = [1, 1]} : vector<8x128xf32> to vector<1x128xf32>
    %333 = vector.broadcast %332 : vector<1x128xf32> to vector<8x128xf32>
    %334 = arith.cmpf olt, %333, %269 : vector<8x128xf32>
    %335 = vector.broadcast %332 : vector<1x128xf32> to vector<8x128xf32>
    %336 = arith.cmpf oeq, %335, %269 : vector<8x128xf32>
    %c3_i32_91 = arith.constant 3 : i32
    %337 = vector.broadcast %c3_i32_91 : i32 to vector<8x128xi32>
    %338 = arith.cmpi sgt, %4, %337 : vector<8x128xi32>
    %339 = arith.andi %336, %338 : vector<8x128xi1>
    %340 = arith.ori %334, %339 : vector<8x128xi1>
    %341 = arith.extui %340 : vector<8x128xi1> to vector<8x128xi32>
    %342 = arith.addi %331, %341 : vector<8x128xi32>
    %343 = vector.extract_strided_slice %269 {offsets = [4, 0], sizes = [1, 128], strides = [1, 1]} : vector<8x128xf32> to vector<1x128xf32>
    %344 = vector.broadcast %343 : vector<1x128xf32> to vector<8x128xf32>
    %345 = arith.cmpf olt, %344, %269 : vector<8x128xf32>
    %346 = vector.broadcast %343 : vector<1x128xf32> to vector<8x128xf32>
    %347 = arith.cmpf oeq, %346, %269 : vector<8x128xf32>
    %c4_i32_92 = arith.constant 4 : i32
    %348 = vector.broadcast %c4_i32_92 : i32 to vector<8x128xi32>
    %349 = arith.cmpi sgt, %4, %348 : vector<8x128xi32>
    %350 = arith.andi %347, %349 : vector<8x128xi1>
    %351 = arith.ori %345, %350 : vector<8x128xi1>
    %352 = arith.extui %351 : vector<8x128xi1> to vector<8x128xi32>
    %353 = arith.addi %342, %352 : vector<8x128xi32>
    %354 = vector.extract_strided_slice %269 {offsets = [5, 0], sizes = [1, 128], strides = [1, 1]} : vector<8x128xf32> to vector<1x128xf32>
    %355 = vector.broadcast %354 : vector<1x128xf32> to vector<8x128xf32>
    %356 = arith.cmpf olt, %355, %269 : vector<8x128xf32>
    %357 = vector.broadcast %354 : vector<1x128xf32> to vector<8x128xf32>
    %358 = arith.cmpf oeq, %357, %269 : vector<8x128xf32>
    %c5_i32_93 = arith.constant 5 : i32
    %359 = vector.broadcast %c5_i32_93 : i32 to vector<8x128xi32>
    %360 = arith.cmpi sgt, %4, %359 : vector<8x128xi32>
    %361 = arith.andi %358, %360 : vector<8x128xi1>
    %362 = arith.ori %356, %361 : vector<8x128xi1>
    %363 = arith.extui %362 : vector<8x128xi1> to vector<8x128xi32>
    %364 = arith.addi %353, %363 : vector<8x128xi32>
    %365 = vector.extract_strided_slice %269 {offsets = [6, 0], sizes = [1, 128], strides = [1, 1]} : vector<8x128xf32> to vector<1x128xf32>
    %366 = vector.broadcast %365 : vector<1x128xf32> to vector<8x128xf32>
    %367 = arith.cmpf olt, %366, %269 : vector<8x128xf32>
    %368 = vector.broadcast %365 : vector<1x128xf32> to vector<8x128xf32>
    %369 = arith.cmpf oeq, %368, %269 : vector<8x128xf32>
    %c6_i32_94 = arith.constant 6 : i32
    %370 = vector.broadcast %c6_i32_94 : i32 to vector<8x128xi32>
    %371 = arith.cmpi sgt, %4, %370 : vector<8x128xi32>
    %372 = arith.andi %369, %371 : vector<8x128xi1>
    %373 = arith.ori %367, %372 : vector<8x128xi1>
    %374 = arith.extui %373 : vector<8x128xi1> to vector<8x128xi32>
    %375 = arith.addi %364, %374 : vector<8x128xi32>
    %376 = vector.extract_strided_slice %269 {offsets = [7, 0], sizes = [1, 128], strides = [1, 1]} : vector<8x128xf32> to vector<1x128xf32>
    %377 = vector.broadcast %376 : vector<1x128xf32> to vector<8x128xf32>
    %378 = arith.cmpf olt, %377, %269 : vector<8x128xf32>
    %379 = vector.broadcast %376 : vector<1x128xf32> to vector<8x128xf32>
    %380 = arith.cmpf oeq, %379, %269 : vector<8x128xf32>
    %c7_i32_95 = arith.constant 7 : i32
    %381 = vector.broadcast %c7_i32_95 : i32 to vector<8x128xi32>
    %382 = arith.cmpi sgt, %4, %381 : vector<8x128xi32>
    %383 = arith.andi %380, %382 : vector<8x128xi1>
    %384 = arith.ori %378, %383 : vector<8x128xi1>
    %385 = arith.extui %384 : vector<8x128xi1> to vector<8x128xi32>
    %386 = arith.addi %375, %385 : vector<8x128xi32>
    %c1_i32_96 = arith.constant 1 : i32
    %387 = vector.broadcast %c1_i32_96 : i32 to vector<8x128xi32>
    %388 = arith.cmpi eq, %386, %387 : vector<8x128xi32>
    %cst_97 = arith.constant 0.000000e+00 : f32
    %389 = vector.broadcast %cst_97 : f32 to vector<8x128xf32>
    %390 = arith.select %388, %269, %389 : vector<8x128xi1>, vector<8x128xf32>
    %cst_98 = arith.constant dense<0.000000e+00> : vector<128xf32>
    %391 = vector.multi_reduction <add>, %390, %cst_98 [0] : vector<8x128xf32> to vector<128xf32>
    %392 = vector.shape_cast %391 : vector<128xf32> to vector<1x128xf32>
    %c2_i32_99 = arith.constant 2 : i32
    %393 = vector.broadcast %c2_i32_99 : i32 to vector<8x128xi32>
    %394 = arith.cmpi eq, %386, %393 : vector<8x128xi32>
    %cst_100 = arith.constant 0.000000e+00 : f32
    %395 = vector.broadcast %cst_100 : f32 to vector<8x128xf32>
    %396 = arith.select %394, %269, %395 : vector<8x128xi1>, vector<8x128xf32>
    %cst_101 = arith.constant dense<0.000000e+00> : vector<128xf32>
    %397 = vector.multi_reduction <add>, %396, %cst_101 [0] : vector<8x128xf32> to vector<128xf32>
    %398 = vector.shape_cast %397 : vector<128xf32> to vector<1x128xf32>
    %399 = arith.subf %398, %392 : vector<1x128xf32>
    %cst_102 = arith.constant 7.500000e-01 : f32
    %400 = vector.broadcast %cst_102 : f32 to vector<1x128xf32>
    %401 = arith.mulf %400, %399 : vector<1x128xf32>
    %402 = arith.addf %392, %401 : vector<1x128xf32>
    %c3_i32_103 = arith.constant 3 : i32
    %403 = vector.broadcast %c3_i32_103 : i32 to vector<8x128xi32>
    %404 = arith.cmpi eq, %386, %403 : vector<8x128xi32>
    %cst_104 = arith.constant 0.000000e+00 : f32
    %405 = vector.broadcast %cst_104 : f32 to vector<8x128xf32>
    %406 = arith.select %404, %269, %405 : vector<8x128xi1>, vector<8x128xf32>
    %cst_105 = arith.constant dense<0.000000e+00> : vector<128xf32>
    %407 = vector.multi_reduction <add>, %406, %cst_105 [0] : vector<8x128xf32> to vector<128xf32>
    %408 = vector.shape_cast %407 : vector<128xf32> to vector<1x128xf32>
    %c4_i32_106 = arith.constant 4 : i32
    %409 = vector.broadcast %c4_i32_106 : i32 to vector<8x128xi32>
    %410 = arith.cmpi eq, %386, %409 : vector<8x128xi32>
    %cst_107 = arith.constant 0.000000e+00 : f32
    %411 = vector.broadcast %cst_107 : f32 to vector<8x128xf32>
    %412 = arith.select %410, %269, %411 : vector<8x128xi1>, vector<8x128xf32>
    %cst_108 = arith.constant dense<0.000000e+00> : vector<128xf32>
    %413 = vector.multi_reduction <add>, %412, %cst_108 [0] : vector<8x128xf32> to vector<128xf32>
    %414 = vector.shape_cast %413 : vector<128xf32> to vector<1x128xf32>
    %415 = arith.subf %414, %408 : vector<1x128xf32>
    %cst_109 = arith.constant 5.000000e-01 : f32
    %416 = vector.broadcast %cst_109 : f32 to vector<1x128xf32>
    %417 = arith.mulf %416, %415 : vector<1x128xf32>
    %418 = arith.addf %408, %417 : vector<1x128xf32>
    %c5_i32_110 = arith.constant 5 : i32
    %419 = vector.broadcast %c5_i32_110 : i32 to vector<8x128xi32>
    %420 = arith.cmpi eq, %386, %419 : vector<8x128xi32>
    %cst_111 = arith.constant 0.000000e+00 : f32
    %421 = vector.broadcast %cst_111 : f32 to vector<8x128xf32>
    %422 = arith.select %420, %269, %421 : vector<8x128xi1>, vector<8x128xf32>
    %cst_112 = arith.constant dense<0.000000e+00> : vector<128xf32>
    %423 = vector.multi_reduction <add>, %422, %cst_112 [0] : vector<8x128xf32> to vector<128xf32>
    %424 = vector.shape_cast %423 : vector<128xf32> to vector<1x128xf32>
    %c6_i32_113 = arith.constant 6 : i32
    %425 = vector.broadcast %c6_i32_113 : i32 to vector<8x128xi32>
    %426 = arith.cmpi eq, %386, %425 : vector<8x128xi32>
    %cst_114 = arith.constant 0.000000e+00 : f32
    %427 = vector.broadcast %cst_114 : f32 to vector<8x128xf32>
    %428 = arith.select %426, %269, %427 : vector<8x128xi1>, vector<8x128xf32>
    %cst_115 = arith.constant dense<0.000000e+00> : vector<128xf32>
    %429 = vector.multi_reduction <add>, %428, %cst_115 [0] : vector<8x128xf32> to vector<128xf32>
    %430 = vector.shape_cast %429 : vector<128xf32> to vector<1x128xf32>
    %431 = arith.subf %430, %424 : vector<1x128xf32>
    %cst_116 = arith.constant 2.500000e-01 : f32
    %432 = vector.broadcast %cst_116 : f32 to vector<1x128xf32>
    %433 = arith.mulf %432, %431 : vector<1x128xf32>
    %434 = arith.addf %424, %433 : vector<1x128xf32>
    %cst_117 = arith.constant dense<0xFF800000> : vector<128xf32>
    %435 = vector.multi_reduction <maximumf>, %269, %cst_117 [0] : vector<8x128xf32> to vector<128xf32>
    %436 = vector.shape_cast %435 : vector<128xf32> to vector<1x128xf32>
    %437 = arith.cmpf one, %273, %273 : vector<1x128xf32>
    %cst_118 = arith.constant -1.000000e+00 : f32
    %438 = vector.broadcast %cst_118 : f32 to vector<1x128xf32>
    %439 = arith.select %437, %438, %273 : vector<1x128xi1>, vector<1x128xf32>
    %cst_119 = arith.constant -3.40282347E+38 : f32
    %cst_120 = arith.constant 3.40282347E+38 : f32
    %440 = vector.broadcast %cst_119 : f32 to vector<1x128xf32>
    %441 = arith.maximumf %440, %439 : vector<1x128xf32>
    %442 = vector.broadcast %cst_120 : f32 to vector<1x128xf32>
    %443 = arith.minimumf %442, %441 : vector<1x128xf32>
    %c1_121 = arith.constant 1 : index
    %c0_122 = arith.constant 0 : index
    %c0_123 = arith.constant 0 : index
    %444 = vector.load %arg2[%c1_121, %c0_122, %c0_123] : memref<2x8x128xf32, #tpu.memory_space<vmem>>, vector<1x1x128xf32>
    %445 = vector.shape_cast %444 : vector<1x1x128xf32> to vector<1x128xf32>
    %446 = vector.shape_cast %443 : vector<1x128xf32> to vector<1x1x128xf32>
    tpu.vector_store %arg2[%c1_121, %c0_122, %c0_123], %446 {strides = array<i32>} : memref<2x8x128xf32, #tpu.memory_space<vmem>>, vector<1x1x128xf32>,
    %447 = arith.cmpf one, %281, %281 : vector<1x128xf32>
    %cst_124 = arith.constant -1.000000e+00 : f32
    %448 = vector.broadcast %cst_124 : f32 to vector<1x128xf32>
    %449 = arith.select %447, %448, %281 : vector<1x128xi1>, vector<1x128xf32>
    %cst_125 = arith.constant -3.40282347E+38 : f32
    %cst_126 = arith.constant 3.40282347E+38 : f32
    %450 = vector.broadcast %cst_125 : f32 to vector<1x128xf32>
    %451 = arith.maximumf %450, %449 : vector<1x128xf32>
    %452 = vector.broadcast %cst_126 : f32 to vector<1x128xf32>
    %453 = arith.minimumf %452, %451 : vector<1x128xf32>
    %c1_127 = arith.constant 1 : index
    %c1_128 = arith.constant 1 : index
    %c0_129 = arith.constant 0 : index
    %454 = vector.load %arg2[%c1_127, %c1_128, %c0_129] : memref<2x8x128xf32, #tpu.memory_space<vmem>>, vector<1x1x128xf32>
    %455 = vector.shape_cast %454 : vector<1x1x128xf32> to vector<1x128xf32>
    %456 = vector.shape_cast %453 : vector<1x128xf32> to vector<1x1x128xf32>
    tpu.vector_store %arg2[%c1_127, %c1_128, %c0_129], %456 {strides = array<i32>} : memref<2x8x128xf32, #tpu.memory_space<vmem>>, vector<1x1x128xf32>,
    %457 = arith.cmpf one, %290, %290 : vector<1x128xf32>
    %cst_130 = arith.constant -1.000000e+00 : f32
    %458 = vector.broadcast %cst_130 : f32 to vector<1x128xf32>
    %459 = arith.select %457, %458, %290 : vector<1x128xi1>, vector<1x128xf32>
    %cst_131 = arith.constant -3.40282347E+38 : f32
    %cst_132 = arith.constant 3.40282347E+38 : f32
    %460 = vector.broadcast %cst_131 : f32 to vector<1x128xf32>
    %461 = arith.maximumf %460, %459 : vector<1x128xf32>
    %462 = vector.broadcast %cst_132 : f32 to vector<1x128xf32>
    %463 = arith.minimumf %462, %461 : vector<1x128xf32>
    %c1_133 = arith.constant 1 : index
    %c2_134 = arith.constant 2 : index
    %c0_135 = arith.constant 0 : index
    %464 = vector.load %arg2[%c1_133, %c2_134, %c0_135] : memref<2x8x128xf32, #tpu.memory_space<vmem>>, vector<1x1x128xf32>
    %465 = vector.shape_cast %464 : vector<1x1x128xf32> to vector<1x128xf32>
    %466 = vector.shape_cast %463 : vector<1x128xf32> to vector<1x1x128xf32>
    tpu.vector_store %arg2[%c1_133, %c2_134, %c0_135], %466 {strides = array<i32>} : memref<2x8x128xf32, #tpu.memory_space<vmem>>, vector<1x1x128xf32>,
    %467 = arith.cmpf one, %297, %297 : vector<1x128xf32>
    %cst_136 = arith.constant -1.000000e+00 : f32
    %468 = vector.broadcast %cst_136 : f32 to vector<1x128xf32>
    %469 = arith.select %467, %468, %297 : vector<1x128xi1>, vector<1x128xf32>
    %cst_137 = arith.constant -3.40282347E+38 : f32
    %cst_138 = arith.constant 3.40282347E+38 : f32
    %470 = vector.broadcast %cst_137 : f32 to vector<1x128xf32>
    %471 = arith.maximumf %470, %469 : vector<1x128xf32>
    %472 = vector.broadcast %cst_138 : f32 to vector<1x128xf32>
    %473 = arith.minimumf %472, %471 : vector<1x128xf32>
    %c1_139 = arith.constant 1 : index
    %c3_140 = arith.constant 3 : index
    %c0_141 = arith.constant 0 : index
    %474 = vector.load %arg2[%c1_139, %c3_140, %c0_141] : memref<2x8x128xf32, #tpu.memory_space<vmem>>, vector<1x1x128xf32>
    %475 = vector.shape_cast %474 : vector<1x1x128xf32> to vector<1x128xf32>
    %476 = vector.shape_cast %473 : vector<1x128xf32> to vector<1x1x128xf32>
    tpu.vector_store %arg2[%c1_139, %c3_140, %c0_141], %476 {strides = array<i32>} : memref<2x8x128xf32, #tpu.memory_space<vmem>>, vector<1x1x128xf32>,
    %477 = arith.cmpf one, %402, %402 : vector<1x128xf32>
    %cst_142 = arith.constant -1.000000e+00 : f32
    %478 = vector.broadcast %cst_142 : f32 to vector<1x128xf32>
    %479 = arith.select %477, %478, %402 : vector<1x128xi1>, vector<1x128xf32>
    %cst_143 = arith.constant -3.40282347E+38 : f32
    %cst_144 = arith.constant 3.40282347E+38 : f32
    %480 = vector.broadcast %cst_143 : f32 to vector<1x128xf32>
    %481 = arith.maximumf %480, %479 : vector<1x128xf32>
    %482 = vector.broadcast %cst_144 : f32 to vector<1x128xf32>
    %483 = arith.minimumf %482, %481 : vector<1x128xf32>
    %c1_145 = arith.constant 1 : index
    %c4_146 = arith.constant 4 : index
    %c0_147 = arith.constant 0 : index
    %484 = vector.load %arg2[%c1_145, %c4_146, %c0_147] : memref<2x8x128xf32, #tpu.memory_space<vmem>>, vector<1x1x128xf32>
    %485 = vector.shape_cast %484 : vector<1x1x128xf32> to vector<1x128xf32>
    %486 = vector.shape_cast %483 : vector<1x128xf32> to vector<1x1x128xf32>
    tpu.vector_store %arg2[%c1_145, %c4_146, %c0_147], %486 {strides = array<i32>} : memref<2x8x128xf32, #tpu.memory_space<vmem>>, vector<1x1x128xf32>,
    %487 = arith.cmpf one, %418, %418 : vector<1x128xf32>
    %cst_148 = arith.constant -1.000000e+00 : f32
    %488 = vector.broadcast %cst_148 : f32 to vector<1x128xf32>
    %489 = arith.select %487, %488, %418 : vector<1x128xi1>, vector<1x128xf32>
    %cst_149 = arith.constant -3.40282347E+38 : f32
    %cst_150 = arith.constant 3.40282347E+38 : f32
    %490 = vector.broadcast %cst_149 : f32 to vector<1x128xf32>
    %491 = arith.maximumf %490, %489 : vector<1x128xf32>
    %492 = vector.broadcast %cst_150 : f32 to vector<1x128xf32>
    %493 = arith.minimumf %492, %491 : vector<1x128xf32>
    %c1_151 = arith.constant 1 : index
    %c5_152 = arith.constant 5 : index
    %c0_153 = arith.constant 0 : index
    %494 = vector.load %arg2[%c1_151, %c5_152, %c0_153] : memref<2x8x128xf32, #tpu.memory_space<vmem>>, vector<1x1x128xf32>
    %495 = vector.shape_cast %494 : vector<1x1x128xf32> to vector<1x128xf32>
    %496 = vector.shape_cast %493 : vector<1x128xf32> to vector<1x1x128xf32>
    tpu.vector_store %arg2[%c1_151, %c5_152, %c0_153], %496 {strides = array<i32>} : memref<2x8x128xf32, #tpu.memory_space<vmem>>, vector<1x1x128xf32>,
    %497 = arith.cmpf one, %434, %434 : vector<1x128xf32>
    %cst_154 = arith.constant -1.000000e+00 : f32
    %498 = vector.broadcast %cst_154 : f32 to vector<1x128xf32>
    %499 = arith.select %497, %498, %434 : vector<1x128xi1>, vector<1x128xf32>
    %cst_155 = arith.constant -3.40282347E+38 : f32
    %cst_156 = arith.constant 3.40282347E+38 : f32
    %500 = vector.broadcast %cst_155 : f32 to vector<1x128xf32>
    %501 = arith.maximumf %500, %499 : vector<1x128xf32>
    %502 = vector.broadcast %cst_156 : f32 to vector<1x128xf32>
    %503 = arith.minimumf %502, %501 : vector<1x128xf32>
    %c1_157 = arith.constant 1 : index
    %c6_158 = arith.constant 6 : index
    %c0_159 = arith.constant 0 : index
    %504 = vector.load %arg2[%c1_157, %c6_158, %c0_159] : memref<2x8x128xf32, #tpu.memory_space<vmem>>, vector<1x1x128xf32>
    %505 = vector.shape_cast %504 : vector<1x1x128xf32> to vector<1x128xf32>
    %506 = vector.shape_cast %503 : vector<1x128xf32> to vector<1x1x128xf32>
    tpu.vector_store %arg2[%c1_157, %c6_158, %c0_159], %506 {strides = array<i32>} : memref<2x8x128xf32, #tpu.memory_space<vmem>>, vector<1x1x128xf32>,
    %507 = arith.cmpf one, %436, %436 : vector<1x128xf32>
    %cst_160 = arith.constant -1.000000e+00 : f32
    %508 = vector.broadcast %cst_160 : f32 to vector<1x128xf32>
    %509 = arith.select %507, %508, %436 : vector<1x128xi1>, vector<1x128xf32>
    %cst_161 = arith.constant -3.40282347E+38 : f32
    %cst_162 = arith.constant 3.40282347E+38 : f32
    %510 = vector.broadcast %cst_161 : f32 to vector<1x128xf32>
    %511 = arith.maximumf %510, %509 : vector<1x128xf32>
    %512 = vector.broadcast %cst_162 : f32 to vector<1x128xf32>
    %513 = arith.minimumf %512, %511 : vector<1x128xf32>
    %c1_163 = arith.constant 1 : index
    %c7_164 = arith.constant 7 : index
    %c0_165 = arith.constant 0 : index
    %514 = vector.load %arg2[%c1_163, %c7_164, %c0_165] : memref<2x8x128xf32, #tpu.memory_space<vmem>>, vector<1x1x128xf32>
    %515 = vector.shape_cast %514 : vector<1x1x128xf32> to vector<1x128xf32>
    %516 = vector.shape_cast %513 : vector<1x128xf32> to vector<1x1x128xf32>
    tpu.vector_store %arg2[%c1_163, %c7_164, %c0_165], %516 {strides = array<i32>} : memref<2x8x128xf32, #tpu.memory_space<vmem>>, vector<1x1x128xf32>,
    return
  }
}

</mosaic_0001>

<llo_original>
// kernel: tpu_custom_call.1
$region0: #{tpu_custom_call.1}
  #allocation0 [shape = 'u32[]', space=smem, size = 0x4, offset = 0x4, fixed_abs, tag = 'smem constant byte address 0x4 - core index']
  #allocation1 [shape = 'u32[144,128]{1,0:T(1,128)}', space=vmem, size = 0x12000, scoped, tag = 'internal scratch']
  %s0 = inlined_call_operand.hbm [shape: f32[64,128], index: 0, kind: input, shape index: {}]
  %s1 = inlined_call_operand.hbm [shape: f32[128,128], index: 1, kind: input, shape index: {}]
  %s2 = inlined_call_operand.hbm [shape: f32[2,8,128], index: 2, kind: output, shape index: {}]
  %s3 = sld [smem:[#allocation0]]
  $region26: #{tpu_custom_call.1} parent=0
    _
  %s5 = ssub.s32 1, %s3
  %s6 = scalar_select 0, %s5, %s3
  $region1: #{tpu_custom_call.1} parent=0
    #allocation2 [shape = 'u8[32768]{0}', space=vmem, size = 0x8000, scoped, tag = 'input window, operand 0, single buffered']
    #allocation3 [shape = 's32[1]{0}', space=sflag, size = 0x4, scoped, tag = 'scoped memory for tpu_custom_call.1']
    #allocation4 [shape = 's32[1]{0}', space=sflag, size = 0x4, scoped, tag = 'scoped memory for tpu_custom_call.1']
    #allocation5 [shape = 'u8[65536]{0}', space=vmem, size = 0x10000, scoped, tag = 'input window, operand 1, single buffered']
    #allocation6 [shape = 's32[1]{0}', space=sflag, size = 0x4, scoped, tag = 'scoped memory for tpu_custom_call.1']
    #allocation7 [shape = 'u8[8192]{0}', space=vmem, size = 0x2000, scoped, tag = 'output window, operand 0, single buffered']
    %7 = vsyncpa [#allocation3], 0
    %8 = vsyncpa [#allocation6], 0
    %9 = vsyncpa [#allocation4], 0
    // Predicated region
    $region2: #{tpu_custom_call.1} parent=1 // pred_check
      _
    $region3: #{tpu_custom_call.1} parent=1 // pred_check_branch
      %11 = sbr.rel (0) target = $region5
    $region4: #{tpu_custom_call.1} parent=1 // pred_region
      %s13 = ssub.s32 1024, 1024
      %14 = vsyncadd [#allocation3], %s13
      %s15 = sshll.u32 [#allocation2], 4
      %s16 = int_to_ptr.vmem [resolvable:$true] %s15
      %21 = dma.hbm_to_vmem [thread:$0]  %s0, 1024, %s16, [#allocation3], 128, 128, 8
    $region5: #{tpu_custom_call.1} parent=1 // pred_fallthru
      _
    // Predicated region
    $region6: #{tpu_custom_call.1} parent=1 // pred_check
      _
    $region7: #{tpu_custom_call.1} parent=1 // pred_check_branch
      %23 = sbr.rel (0) target = $region9
    $region8: #{tpu_custom_call.1} parent=1 // pred_region
      %s25 = ssub.s32 2048, 2048
      %26 = vsyncadd [#allocation6], %s25
      %s27 = sshll.u32 [#allocation5], 4
      %s28 = int_to_ptr.vmem [resolvable:$true] %s27
      %33 = dma.hbm_to_vmem [thread:$0]  %s1, 2048, %s28, [#allocation6], 128, 128, 8
    $region9: #{tpu_custom_call.1} parent=1 // pred_fallthru
      _
    // Predicated region
    $region10: #{tpu_custom_call.1} parent=1 // pred_check
      _
    $region11: #{tpu_custom_call.1} parent=1 // pred_check_branch
      %35 = sbr.rel (0) target = $region13
    $region12: #{tpu_custom_call.1} parent=1 // pred_region
      %36 = dma.done [#allocation3], 1024
    $region13: #{tpu_custom_call.1} parent=1 // pred_fallthru
      _
    // Predicated region
    $region14: #{tpu_custom_call.1} parent=1 // pred_check
      _
    $region15: #{tpu_custom_call.1} parent=1 // pred_check_branch
      %38 = sbr.rel (0) target = $region17
    $region16: #{tpu_custom_call.1} parent=1 // pred_region
      %39 = dma.done [#allocation6], 2048
    $region17: #{tpu_custom_call.1} parent=1 // pred_fallthru
      _
    %v40 = vld [vmem:[#allocation2] sm:$0xff]
    %v41 = vld [vmem:[#allocation2 + $0x8] sm:$0xff]
    %v42 = vld [vmem:[#allocation2 + $0x10] sm:$0xff]
    %v43 = vld [vmem:[#allocation2 + $0x18] sm:$0xff]
    %v44 = vld [vmem:[#allocation2 + $0x20] sm:$0xff]
    %v45 = vld [vmem:[#allocation2 + $0x28] sm:$0xff]
    %v46 = vld [vmem:[#allocation2 + $0x30] sm:$0xff]
    %v47 = vld [vmem:[#allocation2 + $0x38] sm:$0xff]
    %v48 = vld [vmem:[#allocation5] sm:$0xff]
    %v49 = vld [vmem:[#allocation5 + $0x8] sm:$0xff]
    %v50 = vld [vmem:[#allocation5 + $0x10] sm:$0xff]
    %v51 = vld [vmem:[#allocation5 + $0x18] sm:$0xff]
    %v52 = vld [vmem:[#allocation5 + $0x20] sm:$0xff]
    %v53 = vld [vmem:[#allocation5 + $0x28] sm:$0xff]
    %v54 = vld [vmem:[#allocation5 + $0x30] sm:$0xff]
    %v55 = vld [vmem:[#allocation5 + $0x38] sm:$0xff]
    %v56 = vld [vmem:[#allocation5 + $0x40] sm:$0xff]
    %v57 = vld [vmem:[#allocation5 + $0x48] sm:$0xff]
    %v58 = vld [vmem:[#allocation5 + $0x50] sm:$0xff]
    %v59 = vld [vmem:[#allocation5 + $0x58] sm:$0xff]
    %v60 = vld [vmem:[#allocation5 + $0x60] sm:$0xff]
    %v61 = vld [vmem:[#allocation5 + $0x68] sm:$0xff]
    %v62 = vld [vmem:[#allocation5 + $0x70] sm:$0xff]
    %v63 = vld [vmem:[#allocation5 + $0x78] sm:$0xff]
    %64 = vmatprep.subr.mxu0 0.0
    %65 = vmatpush1.msra.mxu0 %v63
    %66 = vmatprep.subr.mxu0 0.0
    %67 = vmatpush1.msra.mxu0 %v62
    %68 = vmatprep.subr.mxu0 0.0
    %69 = vmatpush1.msra.mxu0 %v61
    %70 = vmatprep.subr.mxu0 0.0
    %71 = vmatpush1.msra.mxu0 %v60
    %72 = vmatprep.subr.mxu0 0.0
    %73 = vmatpush1.msra.mxu0 %v59
    %74 = vmatprep.subr.mxu0 0.0
    %75 = vmatpush1.msra.mxu0 %v58
    %76 = vmatprep.subr.mxu0 0.0
    %77 = vmatpush1.msra.mxu0 %v57
    %78 = vmatprep.subr.mxu0 0.0
    %79 = vmatpush1.msra.mxu0 %v56
    %80 = vmatprep.subr.mxu0 0.0
    %81 = vmatpush1.msra.mxu0 %v55
    %82 = vmatprep.subr.mxu0 0.0
    %83 = vmatpush1.msra.mxu0 %v54
    %84 = vmatprep.subr.mxu0 0.0
    %85 = vmatpush1.msra.mxu0 %v53
    %86 = vmatprep.subr.mxu0 0.0
    %87 = vmatpush1.msra.mxu0 %v52
    %88 = vmatprep.subr.mxu0 0.0
    %89 = vmatpush1.msra.mxu0 %v51
    %90 = vmatprep.subr.mxu0 0.0
    %91 = vmatpush1.msra.mxu0 %v50
    %92 = vmatprep.subr.mxu0 0.0
    %93 = vmatpush1.msra.mxu0 %v49
    %94 = vmatprep.subr.mxu0 0.0
    %95 = vmatpush1.msra.mxu0 %v48
    %96 = vmatprep.subr.mxu0 0.0
    %97 = vmatpush2.msra.mxu0 0.0
    %98 = vmatprep.subr.mxu0 0.0
    %99 = vmatpush2.msra.mxu0 0.0
    %100 = vmatprep.subr.mxu0 0.0
    %101 = vmatpush2.msra.mxu0 0.0
    %102 = vmatprep.subr.mxu0 0.0
    %103 = vmatpush2.msra.mxu0 0.0
    %104 = vmatprep.subr.mxu0 0.0
    %105 = vmatpush2.msra.mxu0 0.0
    %106 = vmatprep.subr.mxu0 0.0
    %107 = vmatpush2.msra.mxu0 0.0
    %108 = vmatprep.subr.mxu0 0.0
    %109 = vmatpush2.msra.mxu0 0.0
    %110 = vmatprep.subr.mxu0 0.0
    %111 = vmatpush2.msra.mxu0 0.0
    %112 = vmatprep.subr.mxu0 0.0
    %113 = vmatpush2.msra.mxu0 0.0
    %114 = vmatprep.subr.mxu0 0.0
    %115 = vmatpush2.msra.mxu0 0.0
    %116 = vmatprep.subr.mxu0 0.0
    %117 = vmatpush2.msra.mxu0 0.0
    %118 = vmatprep.subr.mxu0 0.0
    %119 = vmatpush2.msra.mxu0 0.0
    %120 = vmatprep.subr.mxu0 0.0
    %121 = vmatpush2.msra.mxu0 0.0
    %122 = vmatprep.subr.mxu0 0.0
    %123 = vmatpush2.msra.mxu0 0.0
    %124 = vmatprep.subr.mxu0 0.0
    %125 = vmatpush2.msra.mxu0 0.0
    %126 = vmatprep.subr.mxu0 0.0
    %127 = vmatpush2.msra.mxu0 0.0
    %128 = vmatprep.mubr.f32.mxu0 0.0
    %129 = vmatmul.mubr.f32.gmra.mxu0 %v40
    %v130 = vpop.f32.mrf.mxu0
    %v131 = vadd.f32 0.0, %v130
    %v132 = vpop.f32.mrf.mxu0
    %133 = vmatprep.mubr.f32.mxu0 0.0
    %134 = vmatmul.mubr.f32.gmra.mxu0 %v41
    %v135 = vpop.f32.mrf.mxu0
    %v136 = vadd.f32 0.0, %v135
    %v137 = vpop.f32.mrf.mxu0
    %138 = vmatprep.mubr.f32.mxu0 0.0
    %139 = vmatmul.mubr.f32.gmra.mxu0 %v42
    %v140 = vpop.f32.mrf.mxu0
    %v141 = vadd.f32 0.0, %v140
    %v142 = vpop.f32.mrf.mxu0
    %143 = vmatprep.mubr.f32.mxu0 0.0
    %144 = vmatmul.mubr.f32.gmra.mxu0 %v43
    %v145 = vpop.f32.mrf.mxu0
    %v146 = vadd.f32 0.0, %v145
    %v147 = vpop.f32.mrf.mxu0
    %148 = vmatprep.mubr.f32.mxu0 0.0
    %149 = vmatmul.mubr.f32.gmra.mxu0 %v44
    %v150 = vpop.f32.mrf.mxu0
    %v151 = vadd.f32 0.0, %v150
    %v152 = vpop.f32.mrf.mxu0
    %153 = vmatprep.mubr.f32.mxu0 0.0
    %154 = vmatmul.mubr.f32.gmra.mxu0 %v45
    %v155 = vpop.f32.mrf.mxu0
    %v156 = vadd.f32 0.0, %v155
    %v157 = vpop.f32.mrf.mxu0
    %158 = vmatprep.mubr.f32.mxu0 0.0
    %159 = vmatmul.mubr.f32.gmra.mxu0 %v46
    %v160 = vpop.f32.mrf.mxu0
    %v161 = vadd.f32 0.0, %v160
    %v162 = vpop.f32.mrf.mxu0
    %163 = vmatprep.mubr.f32.mxu0 0.0
    %164 = vmatmul.mubr.f32.gmra.mxu0 %v47
    %v165 = vpop.f32.mrf.mxu0
    %v166 = vadd.f32 0.0, %v165
    %v167 = vpop.f32.mrf.mxu0
    %168 = vdwg.mxu0
    %v169 = vmul.f32 %v131, %v131
    %v170 = vmul.f32 %v136, %v136
    %v171 = vmul.f32 %v141, %v141
    %v172 = vmul.f32 %v146, %v146
    %v173 = vmul.f32 %v151, %v151
    %v174 = vmul.f32 %v156, %v156
    %v175 = vmul.f32 %v161, %v161
    %v176 = vmul.f32 %v166, %v166
    %v177 = vlaneseq
    %v178 = vshrl.u32 %v177, 7
    %v179 = vadd.f32 %v169, %v170
    %v180 = vadd.f32 %v179, %v171
    %v181 = vadd.f32 %v180, %v172
    %v182 = vmul.f32 %v181, 0.25
    %v183 = vrot.slane %v182, 4
    %v184 = vadd.f32 %v182, %v183
    %v185 = vrot.slane %v184, 2
    %v186 = vadd.f32 %v184, %v185
    %v187 = vrot.slane %v186, 1
    %v188 = vadd.f32 %v186, %v187
    %v189 = vrcp.pop 8.0
    %v190 = vmul.f32 %v188, %v189
    %v191 = vsub.f32 %v182, %v190
    %v192 = vmul.f32 %v191, %v191
    %v193 = vrot.slane %v192, 4
    %v194 = vadd.f32 %v192, %v193
    %v195 = vrot.slane %v194, 2
    %v196 = vadd.f32 %v194, %v195
    %v197 = vrot.slane %v196, 1
    %v198 = vadd.f32 %v196, %v197
    %v199 = vmul.f32 %v198, %v189
    %v200 = vrsqrt.pop %v199
    %v201 = vmul.f32 %v199, %v200
    %vm202 = vcmp.eq.f32.partialorder %v199, inf
    %v203 = vsel %vm202, %v199, %v201
    %vm204 = vcmp.eq.f32.partialorder %v199, 0.0
    %v205 = vand.u32 %v199, 2147483648
    %v206 = vsel %vm204, %v205, %v203
    %v207 = vrsqrt.pop %v199
    %v208 = vmul.f32 %v191, %v207
    %v209 = vmul.f32 %v208, %v208
    %v210 = vmul.f32 %v209, %v208
    %v211 = vrot.slane %v210, 4
    %v212 = vadd.f32 %v210, %v211
    %v213 = vrot.slane %v212, 2
    %v214 = vadd.f32 %v212, %v213
    %v215 = vrot.slane %v214, 1
    %v216 = vadd.f32 %v214, %v215
    %v217 = vmul.f32 %v216, %v189
    %v218 = vmul.f32 %v209, %v209
    %v219 = vrot.slane %v218, 4
    %v220 = vadd.f32 %v218, %v219
    %v221 = vrot.slane %v220, 2
    %v222 = vadd.f32 %v220, %v221
    %v223 = vrot.slane %v222, 1
    %v224 = vadd.f32 %v222, %v223
    %v225 = vmul.f32 %v224, %v189
    %v226 = vsub.f32 %v225, 3.0
    %v227 = vlaneseq
    %v228 = vshrl.u32 %v227, 7
    %v229 = vsub.s32 0, %v228
    %v230 = vrot.slane %v182, %v229
    %vm231 = vcmp.lt.f32.partialorder %v230, %v182
    %vm232 = vcmp.eq.f32.partialorder %v230, %v182
    %vm233 = vcmp.gt.s32.totalorder %v178, 0
    %vm234 = vmand %vm232, %vm233
    %vm235 = vmor %vm231, %vm234
    %v236 = vsel %vm235, 1, 0
    %v237 = vlaneseq
    %v238 = vshrl.u32 %v237, 7
    %v239 = vsub.s32 1, %v238
    %v240 = vrot.slane %v182, %v239
    %vm241 = vcmp.lt.f32.partialorder %v240, %v182
    %vm242 = vcmp.eq.f32.partialorder %v240, %v182
    %vm243 = vcmp.gt.s32.totalorder %v178, 1
    %vm244 = vmand %vm242, %vm243
    %vm245 = vmor %vm241, %vm244
    %v246 = vsel %vm245, 1, 0
    %v247 = vadd.s32 %v236, %v246
    %v248 = vlaneseq
    %v249 = vshrl.u32 %v248, 7
    %v250 = vsub.s32 2, %v249
    %v251 = vrot.slane %v182, %v250
    %vm252 = vcmp.lt.f32.partialorder %v251, %v182
    %vm253 = vcmp.eq.f32.partialorder %v251, %v182
    %vm254 = vcmp.gt.s32.totalorder %v178, 2
    %vm255 = vmand %vm253, %vm254
    %vm256 = vmor %vm252, %vm255
    %v257 = vsel %vm256, 1, 0
    %v258 = vadd.s32 %v247, %v257
    %v259 = vlaneseq
    %v260 = vshrl.u32 %v259, 7
    %v261 = vsub.s32 3, %v260
    %v262 = vrot.slane %v182, %v261
    %vm263 = vcmp.lt.f32.partialorder %v262, %v182
    %vm264 = vcmp.eq.f32.partialorder %v262, %v182
    %vm265 = vcmp.gt.s32.totalorder %v178, 3
    %vm266 = vmand %vm264, %vm265
    %vm267 = vmor %vm263, %vm266
    %v268 = vsel %vm267, 1, 0
    %v269 = vadd.s32 %v258, %v268
    %v270 = vlaneseq
    %v271 = vshrl.u32 %v270, 7
    %v272 = vsub.s32 4, %v271
    %v273 = vrot.slane %v182, %v272
    %vm274 = vcmp.lt.f32.partialorder %v273, %v182
    %vm275 = vcmp.eq.f32.partialorder %v273, %v182
    %vm276 = vcmp.gt.s32.totalorder %v178, 4
    %vm277 = vmand %vm275, %vm276
    %vm278 = vmor %vm274, %vm277
    %v279 = vsel %vm278, 1, 0
    %v280 = vadd.s32 %v269, %v279
    %v281 = vlaneseq
    %v282 = vshrl.u32 %v281, 7
    %v283 = vsub.s32 5, %v282
    %v284 = vrot.slane %v182, %v283
    %vm285 = vcmp.lt.f32.partialorder %v284, %v182
    %vm286 = vcmp.eq.f32.partialorder %v284, %v182
    %vm287 = vcmp.gt.s32.totalorder %v178, 5
    %vm288 = vmand %vm286, %vm287
    %vm289 = vmor %vm285, %vm288
    %v290 = vsel %vm289, 1, 0
    %v291 = vadd.s32 %v280, %v290
    %v292 = vlaneseq
    %v293 = vshrl.u32 %v292, 7
    %v294 = vsub.s32 6, %v293
    %v295 = vrot.slane %v182, %v294
    %vm296 = vcmp.lt.f32.partialorder %v295, %v182
    %vm297 = vcmp.eq.f32.partialorder %v295, %v182
    %vm298 = vcmp.gt.s32.totalorder %v178, 6
    %vm299 = vmand %vm297, %vm298
    %vm300 = vmor %vm296, %vm299
    %v301 = vsel %vm300, 1, 0
    %v302 = vadd.s32 %v291, %v301
    %v303 = vlaneseq
    %v304 = vshrl.u32 %v303, 7
    %v305 = vsub.s32 7, %v304
    %v306 = vrot.slane %v182, %v305
    %vm307 = vcmp.lt.f32.partialorder %v306, %v182
    %vm308 = vcmp.eq.f32.partialorder %v306, %v182
    %vm309 = vcmp.gt.s32.totalorder %v178, 7
    %vm310 = vmand %vm308, %vm309
    %vm311 = vmor %vm307, %vm310
    %v312 = vsel %vm311, 1, 0
    %v313 = vadd.s32 %v302, %v312
    %vm314 = vcmp.eq.s32.totalorder %v313, 1
    %v315 = vsel %vm314, %v182, 0.0
    %v316 = vrot.slane %v315, 4
    %v317 = vadd.f32 %v315, %v316
    %v318 = vrot.slane %v317, 2
    %v319 = vadd.f32 %v317, %v318
    %v320 = vrot.slane %v319, 1
    %v321 = vadd.f32 %v319, %v320
    %vm322 = vcmp.eq.s32.totalorder %v313, 2
    %v323 = vsel %vm322, %v182, 0.0
    %v324 = vrot.slane %v323, 4
    %v325 = vadd.f32 %v323, %v324
    %v326 = vrot.slane %v325, 2
    %v327 = vadd.f32 %v325, %v326
    %v328 = vrot.slane %v327, 1
    %v329 = vadd.f32 %v327, %v328
    %v330 = vsub.f32 %v329, %v321
    %v331 = vmul.f32 %v330, 0.75
    %v332 = vadd.f32 %v321, %v331
    %vm333 = vcmp.eq.s32.totalorder %v313, 3
    %v334 = vsel %vm333, %v182, 0.0
    %v335 = vrot.slane %v334, 4
    %v336 = vadd.f32 %v334, %v335
    %v337 = vrot.slane %v336, 2
    %v338 = vadd.f32 %v336, %v337
    %v339 = vrot.slane %v338, 1
    %v340 = vadd.f32 %v338, %v339
    %vm341 = vcmp.eq.s32.totalorder %v313, 4
    %v342 = vsel %vm341, %v182, 0.0
    %v343 = vrot.slane %v342, 4
    %v344 = vadd.f32 %v342, %v343
    %v345 = vrot.slane %v344, 2
    %v346 = vadd.f32 %v344, %v345
    %v347 = vrot.slane %v346, 1
    %v348 = vadd.f32 %v346, %v347
    %v349 = vsub.f32 %v348, %v340
    %v350 = vmul.f32 %v349, 0.5
    %v351 = vadd.f32 %v340, %v350
    %vm352 = vcmp.eq.s32.totalorder %v313, 5
    %v353 = vsel %vm352, %v182, 0.0
    %v354 = vrot.slane %v353, 4
    %v355 = vadd.f32 %v353, %v354
    %v356 = vrot.slane %v355, 2
    %v357 = vadd.f32 %v355, %v356
    %v358 = vrot.slane %v357, 1
    %v359 = vadd.f32 %v357, %v358
    %vm360 = vcmp.eq.s32.totalorder %v313, 6
    %v361 = vsel %vm360, %v182, 0.0
    %v362 = vrot.slane %v361, 4
    %v363 = vadd.f32 %v361, %v362
    %v364 = vrot.slane %v363, 2
    %v365 = vadd.f32 %v363, %v364
    %v366 = vrot.slane %v365, 1
    %v367 = vadd.f32 %v365, %v366
    %v368 = vsub.f32 %v367, %v359
    %v369 = vmul.f32 %v368, 0.25
    %v370 = vadd.f32 %v359, %v369
    %v371 = vrot.slane %v182, 4
    %v372 = vmax.f32 %v182, %v371
    %v373 = vrot.slane %v372, 2
    %v374 = vmax.f32 %v372, %v373
    %v375 = vrot.slane %v374, 1
    %v376 = vmax.f32 %v374, %v375
    %vm377 = vcmp.ne.f32.partialorder %v190, %v190
    %v378 = vsel %vm377, -1.0, %v190
    %v379 = vmax.f32 %v378, -3.4028235e+38
    %v380 = vmin.f32 %v379, 3.4028235e+38
    %381 = vst [vmem:[#allocation7] sm:$0x1] %v380
    %vm382 = vcmp.ne.f32.partialorder %v206, %v206
    %v383 = vsel %vm382, -1.0, %v206
    %v384 = vmax.f32 %v383, -3.4028235e+38
    %v385 = vmin.f32 %v384, 3.4028235e+38
    %386 = vst [vmem:[#allocation7 + $0x1] sm:$0x1] %v385
    %vm387 = vcmp.ne.f32.partialorder %v217, %v217
    %v388 = vsel %vm387, -1.0, %v217
    %v389 = vmax.f32 %v388, -3.4028235e+38
    %v390 = vmin.f32 %v389, 3.4028235e+38
    %391 = vst [vmem:[#allocation7 + $0x2] sm:$0x1] %v390
    %vm392 = vcmp.ne.f32.partialorder %v226, %v226
    %v393 = vsel %vm392, -1.0, %v226
    %v394 = vmax.f32 %v393, -3.4028235e+38
    %v395 = vmin.f32 %v394, 3.4028235e+38
    %396 = vst [vmem:[#allocation7 + $0x3] sm:$0x1] %v395
    %vm397 = vcmp.ne.f32.partialorder %v332, %v332
    %v398 = vsel %vm397, -1.0, %v332
    %v399 = vmax.f32 %v398, -3.4028235e+38
    %v400 = vmin.f32 %v399, 3.4028235e+38
    %401 = vst [vmem:[#allocation7 + $0x4] sm:$0x1] %v400
    %vm402 = vcmp.ne.f32.partialorder %v351, %v351
    %v403 = vsel %vm402, -1.0, %v351
    %v404 = vmax.f32 %v403, -3.4028235e+38
    %v405 = vmin.f32 %v404, 3.4028235e+38
    %406 = vst [vmem:[#allocation7 + $0x5] sm:$0x1] %v405
    %vm407 = vcmp.ne.f32.partialorder %v370, %v370
    %v408 = vsel %vm407, -1.0, %v370
    %v409 = vmax.f32 %v408, -3.4028235e+38
    %v410 = vmin.f32 %v409, 3.4028235e+38
    %411 = vst [vmem:[#allocation7 + $0x6] sm:$0x1] %v410
    %vm412 = vcmp.ne.f32.partialorder %v376, %v376
    %v413 = vsel %vm412, -1.0, %v376
    %v414 = vmax.f32 %v413, -3.4028235e+38
    %v415 = vmin.f32 %v414, 3.4028235e+38
    %416 = vst [vmem:[#allocation7 + $0x7] sm:$0x1] %v415
    %v417 = vadd.f32 %v173, %v174
    %v418 = vadd.f32 %v417, %v175
    %v419 = vadd.f32 %v418, %v176
    %v420 = vmul.f32 %v419, 0.25
    %v421 = vrot.slane %v420, 4
    %v422 = vadd.f32 %v420, %v421
    %v423 = vrot.slane %v422, 2
    %v424 = vadd.f32 %v422, %v423
    %v425 = vrot.slane %v424, 1
    %v426 = vadd.f32 %v424, %v425
    %v427 = vmul.f32 %v426, %v189
    %v428 = vsub.f32 %v420, %v427
    %v429 = vmul.f32 %v428, %v428
    %v430 = vrot.slane %v429, 4
    %v431 = vadd.f32 %v429, %v430
    %v432 = vrot.slane %v431, 2
    %v433 = vadd.f32 %v431, %v432
    %v434 = vrot.slane %v433, 1
    %v435 = vadd.f32 %v433, %v434
    %v436 = vmul.f32 %v435, %v189
    %v437 = vrsqrt.pop %v436
    %v438 = vmul.f32 %v436, %v437
    %vm439 = vcmp.eq.f32.partialorder %v436, inf
    %v440 = vsel %vm439, %v436, %v438
    %vm441 = vcmp.eq.f32.partialorder %v436, 0.0
    %v442 = vand.u32 %v436, 2147483648
    %v443 = vsel %vm441, %v442, %v440
    %v444 = vrsqrt.pop %v436
    %v445 = vmul.f32 %v428, %v444
    %v446 = vmul.f32 %v445, %v445
    %v447 = vmul.f32 %v446, %v445
    %v448 = vrot.slane %v447, 4
    %v449 = vadd.f32 %v447, %v448
    %v450 = vrot.slane %v449, 2
    %v451 = vadd.f32 %v449, %v450
    %v452 = vrot.slane %v451, 1
    %v453 = vadd.f32 %v451, %v452
    %v454 = vmul.f32 %v453, %v189
    %v455 = vmul.f32 %v446, %v446
    %v456 = vrot.slane %v455, 4
    %v457 = vadd.f32 %v455, %v456
    %v458 = vrot.slane %v457, 2
    %v459 = vadd.f32 %v457, %v458
    %v460 = vrot.slane %v459, 1
    %v461 = vadd.f32 %v459, %v460
    %v462 = vmul.f32 %v461, %v189
    %v463 = vsub.f32 %v462, 3.0
    %v464 = vlaneseq
    %v465 = vshrl.u32 %v464, 7
    %v466 = vsub.s32 0, %v465
    %v467 = vrot.slane %v420, %v466
    %vm468 = vcmp.lt.f32.partialorder %v467, %v420
    %vm469 = vcmp.eq.f32.partialorder %v467, %v420
    %vm470 = vmand %vm469, %vm233
    %vm471 = vmor %vm468, %vm470
    %v472 = vsel %vm471, 1, 0
    %v473 = vlaneseq
    %v474 = vshrl.u32 %v473, 7
    %v475 = vsub.s32 1, %v474
    %v476 = vrot.slane %v420, %v475
    %vm477 = vcmp.lt.f32.partialorder %v476, %v420
    %vm478 = vcmp.eq.f32.partialorder %v476, %v420
    %vm479 = vmand %vm478, %vm243
    %vm480 = vmor %vm477, %vm479
    %v481 = vsel %vm480, 1, 0
    %v482 = vadd.s32 %v472, %v481
    %v483 = vlaneseq
    %v484 = vshrl.u32 %v483, 7
    %v485 = vsub.s32 2, %v484
    %v486 = vrot.slane %v420, %v485
    %vm487 = vcmp.lt.f32.partialorder %v486, %v420
    %vm488 = vcmp.eq.f32.partialorder %v486, %v420
    %vm489 = vmand %vm488, %vm254
    %vm490 = vmor %vm487, %vm489
    %v491 = vsel %vm490, 1, 0
    %v492 = vadd.s32 %v482, %v491
    %v493 = vlaneseq
    %v494 = vshrl.u32 %v493, 7
    %v495 = vsub.s32 3, %v494
    %v496 = vrot.slane %v420, %v495
    %vm497 = vcmp.lt.f32.partialorder %v496, %v420
    %vm498 = vcmp.eq.f32.partialorder %v496, %v420
    %vm499 = vmand %vm498, %vm265
    %vm500 = vmor %vm497, %vm499
    %v501 = vsel %vm500, 1, 0
    %v502 = vadd.s32 %v492, %v501
    %v503 = vlaneseq
    %v504 = vshrl.u32 %v503, 7
    %v505 = vsub.s32 4, %v504
    %v506 = vrot.slane %v420, %v505
    %vm507 = vcmp.lt.f32.partialorder %v506, %v420
    %vm508 = vcmp.eq.f32.partialorder %v506, %v420
    %vm509 = vmand %vm508, %vm276
    %vm510 = vmor %vm507, %vm509
    %v511 = vsel %vm510, 1, 0
    %v512 = vadd.s32 %v502, %v511
    %v513 = vlaneseq
    %v514 = vshrl.u32 %v513, 7
    %v515 = vsub.s32 5, %v514
    %v516 = vrot.slane %v420, %v515
    %vm517 = vcmp.lt.f32.partialorder %v516, %v420
    %vm518 = vcmp.eq.f32.partialorder %v516, %v420
    %vm519 = vmand %vm518, %vm287
    %vm520 = vmor %vm517, %vm519
    %v521 = vsel %vm520, 1, 0
    %v522 = vadd.s32 %v512, %v521
    %v523 = vlaneseq
    %v524 = vshrl.u32 %v523, 7
    %v525 = vsub.s32 6, %v524
    %v526 = vrot.slane %v420, %v525
    %vm527 = vcmp.lt.f32.partialorder %v526, %v420
    %vm528 = vcmp.eq.f32.partialorder %v526, %v420
    %vm529 = vmand %vm528, %vm298
    %vm530 = vmor %vm527, %vm529
    %v531 = vsel %vm530, 1, 0
    %v532 = vadd.s32 %v522, %v531
    %v533 = vlaneseq
    %v534 = vshrl.u32 %v533, 7
    %v535 = vsub.s32 7, %v534
    %v536 = vrot.slane %v420, %v535
    %vm537 = vcmp.lt.f32.partialorder %v536, %v420
    %vm538 = vcmp.eq.f32.partialorder %v536, %v420
    %vm539 = vmand %vm538, %vm309
    %vm540 = vmor %vm537, %vm539
    %v541 = vsel %vm540, 1, 0
    %v542 = vadd.s32 %v532, %v541
    %vm543 = vcmp.eq.s32.totalorder %v542, 1
    %v544 = vsel %vm543, %v420, 0.0
    %v545 = vrot.slane %v544, 4
    %v546 = vadd.f32 %v544, %v545
    %v547 = vrot.slane %v546, 2
    %v548 = vadd.f32 %v546, %v547
    %v549 = vrot.slane %v548, 1
    %v550 = vadd.f32 %v548, %v549
    %vm551 = vcmp.eq.s32.totalorder %v542, 2
    %v552 = vsel %vm551, %v420, 0.0
    %v553 = vrot.slane %v552, 4
    %v554 = vadd.f32 %v552, %v553
    %v555 = vrot.slane %v554, 2
    %v556 = vadd.f32 %v554, %v555
    %v557 = vrot.slane %v556, 1
    %v558 = vadd.f32 %v556, %v557
    %v559 = vsub.f32 %v558, %v550
    %v560 = vmul.f32 %v559, 0.75
    %v561 = vadd.f32 %v550, %v560
    %vm562 = vcmp.eq.s32.totalorder %v542, 3
    %v563 = vsel %vm562, %v420, 0.0
    %v564 = vrot.slane %v563, 4
    %v565 = vadd.f32 %v563, %v564
    %v566 = vrot.slane %v565, 2
    %v567 = vadd.f32 %v565, %v566
    %v568 = vrot.slane %v567, 1
    %v569 = vadd.f32 %v567, %v568
    %vm570 = vcmp.eq.s32.totalorder %v542, 4
    %v571 = vsel %vm570, %v420, 0.0
    %v572 = vrot.slane %v571, 4
    %v573 = vadd.f32 %v571, %v572
    %v574 = vrot.slane %v573, 2
    %v575 = vadd.f32 %v573, %v574
    %v576 = vrot.slane %v575, 1
    %v577 = vadd.f32 %v575, %v576
    %v578 = vsub.f32 %v577, %v569
    %v579 = vmul.f32 %v578, 0.5
    %v580 = vadd.f32 %v569, %v579
    %vm581 = vcmp.eq.s32.totalorder %v542, 5
    %v582 = vsel %vm581, %v420, 0.0
    %v583 = vrot.slane %v582, 4
    %v584 = vadd.f32 %v582, %v583
    %v585 = vrot.slane %v584, 2
    %v586 = vadd.f32 %v584, %v585
    %v587 = vrot.slane %v586, 1
    %v588 = vadd.f32 %v586, %v587
    %vm589 = vcmp.eq.s32.totalorder %v542, 6
    %v590 = vsel %vm589, %v420, 0.0
    %v591 = vrot.slane %v590, 4
    %v592 = vadd.f32 %v590, %v591
    %v593 = vrot.slane %v592, 2
    %v594 = vadd.f32 %v592, %v593
    %v595 = vrot.slane %v594, 1
    %v596 = vadd.f32 %v594, %v595
    %v597 = vsub.f32 %v596, %v588
    %v598 = vmul.f32 %v597, 0.25
    %v599 = vadd.f32 %v588, %v598
    %v600 = vrot.slane %v420, 4
    %v601 = vmax.f32 %v420, %v600
    %v602 = vrot.slane %v601, 2
    %v603 = vmax.f32 %v601, %v602
    %v604 = vrot.slane %v603, 1
    %v605 = vmax.f32 %v603, %v604
    %vm606 = vcmp.ne.f32.partialorder %v427, %v427
    %v607 = vsel %vm606, -1.0, %v427
    %v608 = vmax.f32 %v607, -3.4028235e+38
    %v609 = vmin.f32 %v608, 3.4028235e+38
    %s610 = scalar_lea.vmem [#allocation7], 8
    %611 = vst [vmem:[%s610] sm:$0x1] %v609
    %vm612 = vcmp.ne.f32.partialorder %v443, %v443
    %v613 = vsel %vm612, -1.0, %v443
    %v614 = vmax.f32 %v613, -3.4028235e+38
    %v615 = vmin.f32 %v614, 3.4028235e+38
    %616 = vst [vmem:[%s610 + $0x1] sm:$0x1] %v615
    %vm617 = vcmp.ne.f32.partialorder %v454, %v454
    %v618 = vsel %vm617, -1.0, %v454
    %v619 = vmax.f32 %v618, -3.4028235e+38
    %v620 = vmin.f32 %v619, 3.4028235e+38
    %621 = vst [vmem:[%s610 + $0x2] sm:$0x1] %v620
    %vm622 = vcmp.ne.f32.partialorder %v463, %v463
    %v623 = vsel %vm622, -1.0, %v463
    %v624 = vmax.f32 %v623, -3.4028235e+38
    %v625 = vmin.f32 %v624, 3.4028235e+38
    %626 = vst [vmem:[%s610 + $0x3] sm:$0x1] %v625
    %vm627 = vcmp.ne.f32.partialorder %v561, %v561
    %v628 = vsel %vm627, -1.0, %v561
    %v629 = vmax.f32 %v628, -3.4028235e+38
    %v630 = vmin.f32 %v629, 3.4028235e+38
    %631 = vst [vmem:[%s610 + $0x4] sm:$0x1] %v630
    %vm632 = vcmp.ne.f32.partialorder %v580, %v580
    %v633 = vsel %vm632, -1.0, %v580
    %v634 = vmax.f32 %v633, -3.4028235e+38
    %v635 = vmin.f32 %v634, 3.4028235e+38
    %636 = vst [vmem:[%s610 + $0x5] sm:$0x1] %v635
    %vm637 = vcmp.ne.f32.partialorder %v599, %v599
    %v638 = vsel %vm637, -1.0, %v599
    %v639 = vmax.f32 %v638, -3.4028235e+38
    %v640 = vmin.f32 %v639, 3.4028235e+38
    %641 = vst [vmem:[%s610 + $0x6] sm:$0x1] %v640
    %vm642 = vcmp.ne.f32.partialorder %v605, %v605
    %v643 = vsel %vm642, -1.0, %v605
    %v644 = vmax.f32 %v643, -3.4028235e+38
    %v645 = vmin.f32 %v644, 3.4028235e+38
    %646 = vst [vmem:[%s610 + $0x7] sm:$0x1] %v645
    // Predicated region
    $region18: #{tpu_custom_call.1} parent=1 // pred_check
      _
    $region19: #{tpu_custom_call.1} parent=1 // pred_check_branch
      %648 = sbr.rel (0) target = $region21
    $region20: #{tpu_custom_call.1} parent=1 // pred_region
      %s650 = ssub.s32 256, 256
      %651 = vsyncadd [#allocation4], %s650
      %s652 = sshll.u32 [#allocation7], 4
      %s653 = int_to_ptr.vmem [resolvable:$true] %s652
      %658 = dma.vmem_to_hbm [thread:$0]  %s653, 256, %s2, [#allocation4], 128, 128, 8
    $region21: #{tpu_custom_call.1} parent=1 // pred_fallthru
      _
    // Predicated region
    $region22: #{tpu_custom_call.1} parent=1 // pred_check
      _
    $region23: #{tpu_custom_call.1} parent=1 // pred_check_branch
      %660 = sbr.rel (0) target = $region25
    $region24: #{tpu_custom_call.1} parent=1 // pred_region
      %661 = dma.done [#allocation4], 256
    $region25: #{tpu_custom_call.1} parent=1 // pred_fallthru
      _
    %662 = vsyncpa [#allocation3], 1
    %663 = vsyncpa [#allocation6], 1
    %664 = vsyncpa [#allocation4], 1

</llo_original>
